<compile_context>
chip_gen: v7x
topology: tpu7x:2x2x1
jax: 0.10.0
libtpu: 0.0.40
codegen_flags: <defaults>
</compile_context>

<pallas_src>
import jax
import jax.numpy as jnp
import numpy as np
from jax.experimental import pallas as pl
from jax.experimental.pallas import tpu as pltpu


# ----------------------------------------------------------------------------
# Fused Pallas kernel: the entire forward pass.
# ----------------------------------------------------------------------------
def _hamida_fused_kernel(x_ref,
                         w1_ref, b1_ref, w2_ref, b2_ref,
                         w3_ref, b3_ref, w4_ref, b4_ref,
                         wfc_ref, bfc_ref, wfc1_ref, bfc1_ref,
                         wcls_ref, bcls_ref,
                         f1_ref, f2_ref, logits_ref):
    def dense(h, w_ref, b_ref):
        return jnp.dot(h, w_ref[...],
                       preferred_element_type=jnp.float32) + b_ref[...]

    h = x_ref[...]                                    # (B, Cin*D*H*W)
    h = jnp.maximum(dense(h, w1_ref, b1_ref), 0.0)    # relu(conv1)
    h = jnp.maximum(dense(h, w2_ref, b2_ref), 0.0)    # relu(conv2(pool1(.)))
    h = jnp.maximum(dense(h, w3_ref, b3_ref), 0.0)    # relu(conv3(pool2(.)))
    h = jnp.maximum(dense(h, w4_ref, b4_ref), 0.0)    # relu(conv4)  -> (B, 70)
    f1 = dense(h, wfc_ref, bfc_ref)                   # fc      -> (B, 128)
    f2 = dense(h, wfc1_ref, bfc1_ref)                 # fc1     -> (B, 128)
    logits = dense(f1 * f2, wcls_ref, bcls_ref)       # classifier
    f1_ref[...] = f1
    f2_ref[...] = f2
    logits_ref[...] = logits


_PARAM_ORDER = ("w1", "b1", "w2", "b2", "w3", "b3", "w4", "b4",
                "wfc", "bfc", "wfc1", "bfc1", "wcls", "bcls")


def hamida_forward(params, x):
    """x: (b, h, d, n), exactly like the PyTorch module's forward input."""
    b = x.shape[0]
    # The rearrange + unsqueeze + NCDHW flatten are folded into params["w1"];
    # only a free contiguous reshape remains outside the kernel.
    x2d = x.reshape(b, -1).astype(jnp.float32)
    weights = [params[k] for k in _PARAM_ORDER]
    n_classes = params["wcls"].shape[1]

    args = [x2d] + weights
    in_specs = [pl.BlockSpec(a.shape, lambda i: (0, 0)) for a in args]
    out_shape = (
        jax.ShapeDtypeStruct((b, 128), jnp.float32),
        jax.ShapeDtypeStruct((b, 128), jnp.float32),
        jax.ShapeDtypeStruct((b, n_classes), jnp.float32),
    )
    out_specs = (
        pl.BlockSpec((b, 128), lambda i: (0, 0)),
        pl.BlockSpec((b, 128), lambda i: (0, 0)),
        pl.BlockSpec((b, n_classes), lambda i: (0, 0)),
    )
    return pl.pallas_call(
        _hamida_fused_kernel,
        out_shape=out_shape,
        grid=(1,),
        in_specs=in_specs,
        out_specs=out_specs,
        compiler_params=pltpu.CompilerParams(
            dimension_semantics=("arbitrary",),
            vmem_limit_bytes=32 * 1024 * 1024,   # ~1.4 MB weights; safe on v5e/v6e/v7x
        ),
    )(*args)


# ----------------------------------------------------------------------------
# Init-time conversion: Conv3d -> equivalent dense matrix (NCDHW flatten).
# ----------------------------------------------------------------------------
def _conv3d_dense(weight, bias, in_spatial, stride, padding):
    """Dense form of a PyTorch Conv3d (cross-correlation, dilation=1).

    Returns (M, b_full, out_spatial) such that, per sample,
        flatten_NCDHW(conv(x)) == flatten_NCDHW(x) @ M + b_full
    """
    cout, cin, kd, kh, kw = weight.shape
    di, hi, wi = in_spatial
    n_in = cin * di * hi * wi
    eye = jnp.eye(n_in, dtype=jnp.float32).reshape(n_in, cin, di, hi, wi)
    out = jax.lax.conv_general_dilated(
        eye, weight,
        window_strides=stride,
        padding=[(p, p) for p in padding],
        dimension_numbers=("NCDHW", "OIDHW", "NCDHW"),
        precision=jax.lax.Precision.HIGHEST)      # exact f32 weight values
    _, _, do, ho, wo = out.shape
    m = np.asarray(out.reshape(n_in, cout * do * ho * wo), np.float64)
    b_full = np.repeat(np.asarray(bias, np.float64)[:, None],
                       do * ho * wo, axis=1).reshape(-1)
    return m, b_full, (do, ho, wo)


def _kaiming_normal(key, shape, fan_in):
    return jax.random.normal(key, shape, jnp.float32) * float(np.sqrt(2.0 / fan_in))


def init_params(key, input_channels, n_classes, patch_size=5):
    ks = jax.random.split(key, 9)

    def conv_w(k, cout, cin, kd, kh, kw):
        return _kaiming_normal(k, (cout, cin, kd, kh, kw), cin * kd * kh * kw)

    conv1_w = conv_w(ks[0], 20, 1, 3, 3, 3);   conv1_b = jnp.zeros((20,), jnp.float32)
    pool1_w = conv_w(ks[1], 20, 20, 3, 1, 1);  pool1_b = jnp.zeros((20,), jnp.float32)
    conv2_w = conv_w(ks[2], 35, 20, 3, 3, 3);  conv2_b = jnp.zeros((35,), jnp.float32)
    pool2_w = conv_w(ks[3], 35, 35, 3, 1, 1);  pool2_b = jnp.zeros((35,), jnp.float32)
    conv3_w = conv_w(ks[4], 35, 35, 3, 1, 1);  conv3_b = jnp.zeros((35,), jnp.float32)
    conv4_w = conv_w(ks[5], 35, 35, 2, 1, 1);  conv4_b = jnp.zeros((35,), jnp.float32)

    # Each Conv3d as a dense matrix over the per-sample NCDHW flatten.
    pad1 = (1, 1, 1) if patch_size == 3 else (0, 0, 0)
    in_sp = (input_channels, patch_size, patch_size)    # conv sees (D=n, H=h, W=d)
    m1, v1, sp = _conv3d_dense(conv1_w, conv1_b, in_sp, (1, 1, 1), pad1)
    mp1, vp1, sp = _conv3d_dense(pool1_w, pool1_b, sp, (2, 1, 1), (1, 0, 0))
    mc2, vc2, sp = _conv3d_dense(conv2_w, conv2_b, sp, (1, 1, 1), (1, 0, 0))
    mp2, vp2, sp = _conv3d_dense(pool2_w, pool2_b, sp, (2, 1, 1), (1, 0, 0))
    mc3, vc3, sp = _conv3d_dense(conv3_w, conv3_b, sp, (1, 1, 1), (1, 0, 0))
    mc4, vc4, sp = _conv3d_dense(conv4_w, conv4_b, sp, (2, 1, 1), (1, 0, 0))

    # Fold consecutive *linear* stages (no activation in between):
    #   relu(conv1) -> pool1 -> relu(conv2)  ==  relu(conv1) -> relu(. @ (mp1@mc2))
    #   ... -> pool2 -> relu(conv3)          ==  ...         -> relu(. @ (mp2@mc3))
    m2 = mp1 @ mc2
    v2 = vp1 @ mc2 + vc2
    m3 = mp2 @ mc3
    v3 = vp2 @ mc3 + vc3

    # Fold `rearrange(b h d n -> b n h d)` + unsqueeze(1) into the rows of m1:
    # wrapper flattens x as (h, d, n); conv expects (c=0, D=n, H=h, W=d).
    P, N = patch_size, input_channels
    q_of = np.transpose(np.arange(N * P * P).reshape(N, P, P), (1, 2, 0))  # [h,d,n]
    m1 = m1[q_of.reshape(-1), :]

    features_size = mc4.shape[1]            # = 35 * D4 * H4 * W4 (70 for defaults)

    # FC head (PyTorch nn.Linear: y = x @ W.T + b), stored pre-transposed.
    fc_w = _kaiming_normal(ks[6], (128, features_size), features_size)
    fc1_w = _kaiming_normal(ks[7], (128, features_size), features_size)
    cls_w = _kaiming_normal(ks[8], (n_classes, 128), 128)

    def mat(a):
        return jnp.asarray(np.asarray(a), jnp.float32)

    def row(a):
        return jnp.asarray(np.asarray(a), jnp.float32).reshape(1, -1)

    params = {
        "w1": mat(m1), "b1": row(v1),
        "w2": mat(m2), "b2": row(v2),
        "w3": mat(m3), "b3": row(v3),
        "w4": mat(mc4), "b4": row(vc4),
        "wfc": jnp.asarray(fc_w.T), "bfc": jnp.zeros((1, 128), jnp.float32),
        "wfc1": jnp.asarray(fc1_w.T), "bfc1": jnp.zeros((1, 128), jnp.float32),
        "wcls": jnp.asarray(cls_w.T), "bcls": jnp.zeros((1, n_classes), jnp.float32),
        "features_size": features_size,
    }
    return params


# ----------------------------------------------------------------------------
if __name__ == "__main__":
    batch = 2
    input_channels = 8     # spectral depth (n)
    n_classes = 10
    patch_size = 5

    key = jax.random.PRNGKey(0)
    k_param, k_x = jax.random.split(key)
    params = init_params(k_param, input_channels, n_classes, patch_size)

    # forward() expects (b, h, d, n) = (batch, patch, patch, spectral)
    x = jax.random.normal(
        k_x, (batch, patch_size, patch_size, input_channels), jnp.float32)

    fwd = jax.jit(lambda xx: hamida_forward(params, xx))
    feature1, feature2, logits = fwd(x)
    jax.block_until_ready((feature1, feature2, logits))

    assert feature1.shape == (batch, 128)
    assert feature2.shape == (batch, 128)
    assert logits.shape == (batch, n_classes)
    assert bool(jnp.all(jnp.isfinite(logits)))
    print("KERNEL_OK")
</pallas_src>

<mosaic_0001>
module attributes {stable_mosaic.version = 11 : i64} {
  func.func @_hamida_fused_kernel(%arg0: i32, %arg1: memref<2x200xf32, #tpu.memory_space<vmem>>, %arg2: memref<200x1080xf32, #tpu.memory_space<vmem>>, %arg3: memref<1x1080xf32, #tpu.memory_space<vmem>>, %arg4: memref<1080x105xf32, #tpu.memory_space<vmem>>, %arg5: memref<1x105xf32, #tpu.memory_space<vmem>>, %arg6: memref<105x70xf32, #tpu.memory_space<vmem>>, %arg7: memref<1x70xf32, #tpu.memory_space<vmem>>, %arg8: memref<70x70xf32, #tpu.memory_space<vmem>>, %arg9: memref<1x70xf32, #tpu.memory_space<vmem>>, %arg10: memref<70x128xf32, #tpu.memory_space<vmem>>, %arg11: memref<1x128xf32, #tpu.memory_space<vmem>>, %arg12: memref<70x128xf32, #tpu.memory_space<vmem>>, %arg13: memref<1x128xf32, #tpu.memory_space<vmem>>, %arg14: memref<128x10xf32, #tpu.memory_space<vmem>>, %arg15: memref<1x10xf32, #tpu.memory_space<vmem>>, %arg16: memref<2x128xf32, #tpu.memory_space<vmem>>, %arg17: memref<2x128xf32, #tpu.memory_space<vmem>>, %arg18: memref<2x10xf32, #tpu.memory_space<vmem>>) attributes {dimension_semantics = [#tpu.dimension_semantics<arbitrary>], iteration_bounds = array<i64: 1>, scalar_prefetch = 0 : i64, scratch_operands = 0 : i64, tpu.core_type = #tpu.core_type<tc>, window_params = [{pipeline_mode = #tpu.pipeline_mode<synchronous>, transform_indices = @transform_0, window_bounds = array<i64: 2, 200>}, {pipeline_mode = #tpu.pipeline_mode<synchronous>, transform_indices = @transform_1, window_bounds = array<i64: 200, 1080>}, {pipeline_mode = #tpu.pipeline_mode<synchronous>, transform_indices = @transform_2, window_bounds = array<i64: 1, 1080>}, {pipeline_mode = #tpu.pipeline_mode<synchronous>, transform_indices = @transform_3, window_bounds = array<i64: 1080, 105>}, {pipeline_mode = #tpu.pipeline_mode<synchronous>, transform_indices = @transform_4, window_bounds = array<i64: 1, 105>}, {pipeline_mode = #tpu.pipeline_mode<synchronous>, transform_indices = @transform_5, window_bounds = array<i64: 105, 70>}, {pipeline_mode = #tpu.pipeline_mode<synchronous>, transform_indices = @transform_6, window_bounds = array<i64: 1, 70>}, {pipeline_mode = #tpu.pipeline_mode<synchronous>, transform_indices = @transform_7, window_bounds = array<i64: 70, 70>}, {pipeline_mode = #tpu.pipeline_mode<synchronous>, transform_indices = @transform_8, window_bounds = array<i64: 1, 70>}, {pipeline_mode = #tpu.pipeline_mode<synchronous>, transform_indices = @transform_9, window_bounds = array<i64: 70, 128>}, {pipeline_mode = #tpu.pipeline_mode<synchronous>, transform_indices = @transform_10, window_bounds = array<i64: 1, 128>}, {pipeline_mode = #tpu.pipeline_mode<synchronous>, transform_indices = @transform_11, window_bounds = array<i64: 70, 128>}, {pipeline_mode = #tpu.pipeline_mode<synchronous>, transform_indices = @transform_12, window_bounds = array<i64: 1, 128>}, {pipeline_mode = #tpu.pipeline_mode<synchronous>, transform_indices = @transform_13, window_bounds = array<i64: 128, 10>}, {pipeline_mode = #tpu.pipeline_mode<synchronous>, transform_indices = @transform_14, window_bounds = array<i64: 1, 10>}, {pipeline_mode = #tpu.pipeline_mode<synchronous>, transform_indices = @transform_15, window_bounds = array<i64: 2, 128>}, {pipeline_mode = #tpu.pipeline_mode<synchronous>, transform_indices = @transform_16, window_bounds = array<i64: 2, 128>}, {pipeline_mode = #tpu.pipeline_mode<synchronous>, transform_indices = @transform_17, window_bounds = array<i64: 2, 10>}]} {
    %c0 = arith.constant 0 : index
    %c0_0 = arith.constant 0 : index
    %0 = vector.load %arg1[%c0, %c0_0] : memref<2x200xf32, #tpu.memory_space<vmem>>, vector<2x200xf32>
    %c0_1 = arith.constant 0 : index
    %c0_2 = arith.constant 0 : index
    %1 = vector.load %arg2[%c0_1, %c0_2] : memref<200x1080xf32, #tpu.memory_space<vmem>>, vector<200x1080xf32>
    %cst = arith.constant dense<0.000000e+00> : vector<2x1080xf32>
    %2 = tpu.matmul %0, %1, %cst {dimension_numbers = #tpu.dot_dimension_numbers<[1], [0], [0], [1], [0, 0, 1, 1], [], []>} : vector<2x200xf32>, vector<200x1080xf32>, vector<2x1080xf32> -> vector<2x1080xf32>
    %c0_3 = arith.constant 0 : index
    %c0_4 = arith.constant 0 : index
    %3 = vector.load %arg3[%c0_3, %c0_4] : memref<1x1080xf32, #tpu.memory_space<vmem>>, vector<1x1080xf32>
    %4 = vector.broadcast %3 : vector<1x1080xf32> to vector<2x1080xf32>
    %5 = arith.addf %2, %4 : vector<2x1080xf32>
    %cst_5 = arith.constant 0.000000e+00 : f32
    %6 = vector.broadcast %cst_5 : f32 to vector<2x1080xf32>
    %7 = arith.maximumf %5, %6 : vector<2x1080xf32>
    %c0_6 = arith.constant 0 : index
    %c0_7 = arith.constant 0 : index
    %8 = vector.load %arg4[%c0_6, %c0_7] : memref<1080x105xf32, #tpu.memory_space<vmem>>, vector<1080x105xf32>
    %cst_8 = arith.constant dense<0.000000e+00> : vector<2x105xf32>
    %9 = tpu.matmul %7, %8, %cst_8 {dimension_numbers = #tpu.dot_dimension_numbers<[1], [0], [0], [1], [0, 0, 1, 1], [], []>} : vector<2x1080xf32>, vector<1080x105xf32>, vector<2x105xf32> -> vector<2x105xf32>
    %c0_9 = arith.constant 0 : index
    %c0_10 = arith.constant 0 : index
    %10 = vector.load %arg5[%c0_9, %c0_10] : memref<1x105xf32, #tpu.memory_space<vmem>>, vector<1x105xf32>
    %11 = vector.broadcast %10 : vector<1x105xf32> to vector<2x105xf32>
    %12 = arith.addf %9, %11 : vector<2x105xf32>
    %cst_11 = arith.constant 0.000000e+00 : f32
    %13 = vector.broadcast %cst_11 : f32 to vector<2x105xf32>
    %14 = arith.maximumf %12, %13 : vector<2x105xf32>
    %c0_12 = arith.constant 0 : index
    %c0_13 = arith.constant 0 : index
    %15 = vector.load %arg6[%c0_12, %c0_13] : memref<105x70xf32, #tpu.memory_space<vmem>>, vector<105x70xf32>
    %cst_14 = arith.constant dense<0.000000e+00> : vector<2x70xf32>
    %16 = tpu.matmul %14, %15, %cst_14 {dimension_numbers = #tpu.dot_dimension_numbers<[1], [0], [0], [1], [0, 0, 1, 1], [], []>} : vector<2x105xf32>, vector<105x70xf32>, vector<2x70xf32> -> vector<2x70xf32>
    %c0_15 = arith.constant 0 : index
    %c0_16 = arith.constant 0 : index
    %17 = vector.load %arg7[%c0_15, %c0_16] : memref<1x70xf32, #tpu.memory_space<vmem>>, vector<1x70xf32>
    %18 = vector.broadcast %17 : vector<1x70xf32> to vector<2x70xf32>
    %19 = arith.addf %16, %18 : vector<2x70xf32>
    %cst_17 = arith.constant 0.000000e+00 : f32
    %20 = vector.broadcast %cst_17 : f32 to vector<2x70xf32>
    %21 = arith.maximumf %19, %20 : vector<2x70xf32>
    %c0_18 = arith.constant 0 : index
    %c0_19 = arith.constant 0 : index
    %22 = vector.load %arg8[%c0_18, %c0_19] : memref<70x70xf32, #tpu.memory_space<vmem>>, vector<70x70xf32>
    %cst_20 = arith.constant dense<0.000000e+00> : vector<2x70xf32>
    %23 = tpu.matmul %21, %22, %cst_20 {dimension_numbers = #tpu.dot_dimension_numbers<[1], [0], [0], [1], [0, 0, 1, 1], [], []>} : vector<2x70xf32>, vector<70x70xf32>, vector<2x70xf32> -> vector<2x70xf32>
    %c0_21 = arith.constant 0 : index
    %c0_22 = arith.constant 0 : index
    %24 = vector.load %arg9[%c0_21, %c0_22] : memref<1x70xf32, #tpu.memory_space<vmem>>, vector<1x70xf32>
    %25 = vector.broadcast %24 : vector<1x70xf32> to vector<2x70xf32>
    %26 = arith.addf %23, %25 : vector<2x70xf32>
    %cst_23 = arith.constant 0.000000e+00 : f32
    %27 = vector.broadcast %cst_23 : f32 to vector<2x70xf32>
    %28 = arith.maximumf %26, %27 : vector<2x70xf32>
    %c0_24 = arith.constant 0 : index
    %c0_25 = arith.constant 0 : index
    %29 = vector.load %arg10[%c0_24, %c0_25] : memref<70x128xf32, #tpu.memory_space<vmem>>, vector<70x128xf32>
    %cst_26 = arith.constant dense<0.000000e+00> : vector<2x128xf32>
    %30 = tpu.matmul %28, %29, %cst_26 {dimension_numbers = #tpu.dot_dimension_numbers<[1], [0], [0], [1], [0, 0, 1, 1], [], []>} : vector<2x70xf32>, vector<70x128xf32>, vector<2x128xf32> -> vector<2x128xf32>
    %c0_27 = arith.constant 0 : index
    %c0_28 = arith.constant 0 : index
    %31 = vector.load %arg11[%c0_27, %c0_28] : memref<1x128xf32, #tpu.memory_space<vmem>>, vector<1x128xf32>
    %32 = vector.broadcast %31 : vector<1x128xf32> to vector<2x128xf32>
    %33 = arith.addf %30, %32 : vector<2x128xf32>
    %c0_29 = arith.constant 0 : index
    %c0_30 = arith.constant 0 : index
    %34 = vector.load %arg12[%c0_29, %c0_30] : memref<70x128xf32, #tpu.memory_space<vmem>>, vector<70x128xf32>
    %cst_31 = arith.constant dense<0.000000e+00> : vector<2x128xf32>
    %35 = tpu.matmul %28, %34, %cst_31 {dimension_numbers = #tpu.dot_dimension_numbers<[1], [0], [0], [1], [0, 0, 1, 1], [], []>} : vector<2x70xf32>, vector<70x128xf32>, vector<2x128xf32> -> vector<2x128xf32>
    %c0_32 = arith.constant 0 : index
    %c0_33 = arith.constant 0 : index
    %36 = vector.load %arg13[%c0_32, %c0_33] : memref<1x128xf32, #tpu.memory_space<vmem>>, vector<1x128xf32>
    %37 = vector.broadcast %36 : vector<1x128xf32> to vector<2x128xf32>
    %38 = arith.addf %35, %37 : vector<2x128xf32>
    %39 = arith.mulf %33, %38 : vector<2x128xf32>
    %c0_34 = arith.constant 0 : index
    %c0_35 = arith.constant 0 : index
    %40 = vector.load %arg14[%c0_34, %c0_35] : memref<128x10xf32, #tpu.memory_space<vmem>>, vector<128x10xf32>
    %cst_36 = arith.constant dense<0.000000e+00> : vector<2x10xf32>
    %41 = tpu.matmul %39, %40, %cst_36 {dimension_numbers = #tpu.dot_dimension_numbers<[1], [0], [0], [1], [0, 0, 1, 1], [], []>} : vector<2x128xf32>, vector<128x10xf32>, vector<2x10xf32> -> vector<2x10xf32>
    %c0_37 = arith.constant 0 : index
    %c0_38 = arith.constant 0 : index
    %42 = vector.load %arg15[%c0_37, %c0_38] : memref<1x10xf32, #tpu.memory_space<vmem>>, vector<1x10xf32>
    %43 = vector.broadcast %42 : vector<1x10xf32> to vector<2x10xf32>
    %44 = arith.addf %41, %43 : vector<2x10xf32>
    %c0_39 = arith.constant 0 : index
    %c0_40 = arith.constant 0 : index
    %45 = vector.load %arg16[%c0_39, %c0_40] : memref<2x128xf32, #tpu.memory_space<vmem>>, vector<2x128xf32>
    tpu.vector_store %arg16[%c0_39, %c0_40], %33 {strides = array<i32>} : memref<2x128xf32, #tpu.memory_space<vmem>>, vector<2x128xf32>,
    %c0_41 = arith.constant 0 : index
    %c0_42 = arith.constant 0 : index
    %46 = vector.load %arg17[%c0_41, %c0_42] : memref<2x128xf32, #tpu.memory_space<vmem>>, vector<2x128xf32>
    tpu.vector_store %arg17[%c0_41, %c0_42], %38 {strides = array<i32>} : memref<2x128xf32, #tpu.memory_space<vmem>>, vector<2x128xf32>,
    %c0_43 = arith.constant 0 : index
    %c0_44 = arith.constant 0 : index
    %47 = vector.load %arg18[%c0_43, %c0_44] : memref<2x10xf32, #tpu.memory_space<vmem>>, vector<2x10xf32>
    tpu.vector_store %arg18[%c0_43, %c0_44], %44 {strides = array<i32>} : memref<2x10xf32, #tpu.memory_space<vmem>>, vector<2x10xf32>,
    return
  }
  func.func @transform_0(%arg0: i32) -> (i32, i32) {
    %c0_i32 = arith.constant 0 : i32
    %c0_i32_0 = arith.constant 0 : i32
    %c0_i32_1 = arith.constant 0 : i32
    return %c0_i32, %c0_i32_0 : i32, i32
  }
  func.func @transform_1(%arg0: i32) -> (i32, i32) {
    %c0_i32 = arith.constant 0 : i32
    %c0_i32_0 = arith.constant 0 : i32
    %c0_i32_1 = arith.constant 0 : i32
    return %c0_i32, %c0_i32_0 : i32, i32
  }
  func.func @transform_2(%arg0: i32) -> (i32, i32) {
    %c0_i32 = arith.constant 0 : i32
    %c0_i32_0 = arith.constant 0 : i32
    %c0_i32_1 = arith.constant 0 : i32
    return %c0_i32, %c0_i32_0 : i32, i32
  }
  func.func @transform_3(%arg0: i32) -> (i32, i32) {
    %c0_i32 = arith.constant 0 : i32
    %c0_i32_0 = arith.constant 0 : i32
    %c0_i32_1 = arith.constant 0 : i32
    return %c0_i32, %c0_i32_0 : i32, i32
  }
  func.func @transform_4(%arg0: i32) -> (i32, i32) {
    %c0_i32 = arith.constant 0 : i32
    %c0_i32_0 = arith.constant 0 : i32
    %c0_i32_1 = arith.constant 0 : i32
    return %c0_i32, %c0_i32_0 : i32, i32
  }
  func.func @transform_5(%arg0: i32) -> (i32, i32) {
    %c0_i32 = arith.constant 0 : i32
    %c0_i32_0 = arith.constant 0 : i32
    %c0_i32_1 = arith.constant 0 : i32
    return %c0_i32, %c0_i32_0 : i32, i32
  }
  func.func @transform_6(%arg0: i32) -> (i32, i32) {
    %c0_i32 = arith.constant 0 : i32
    %c0_i32_0 = arith.constant 0 : i32
    %c0_i32_1 = arith.constant 0 : i32
    return %c0_i32, %c0_i32_0 : i32, i32
  }
  func.func @transform_7(%arg0: i32) -> (i32, i32) {
    %c0_i32 = arith.constant 0 : i32
    %c0_i32_0 = arith.constant 0 : i32
    %c0_i32_1 = arith.constant 0 : i32
    return %c0_i32, %c0_i32_0 : i32, i32
  }
  func.func @transform_8(%arg0: i32) -> (i32, i32) {
    %c0_i32 = arith.constant 0 : i32
    %c0_i32_0 = arith.constant 0 : i32
    %c0_i32_1 = arith.constant 0 : i32
    return %c0_i32, %c0_i32_0 : i32, i32
  }
  func.func @transform_9(%arg0: i32) -> (i32, i32) {
    %c0_i32 = arith.constant 0 : i32
    %c0_i32_0 = arith.constant 0 : i32
    %c0_i32_1 = arith.constant 0 : i32
    return %c0_i32, %c0_i32_0 : i32, i32
  }
  func.func @transform_10(%arg0: i32) -> (i32, i32) {
    %c0_i32 = arith.constant 0 : i32
    %c0_i32_0 = arith.constant 0 : i32
    %c0_i32_1 = arith.constant 0 : i32
    return %c0_i32, %c0_i32_0 : i32, i32
  }
  func.func @transform_11(%arg0: i32) -> (i32, i32) {
    %c0_i32 = arith.constant 0 : i32
    %c0_i32_0 = arith.constant 0 : i32
    %c0_i32_1 = arith.constant 0 : i32
    return %c0_i32, %c0_i32_0 : i32, i32
  }
  func.func @transform_12(%arg0: i32) -> (i32, i32) {
    %c0_i32 = arith.constant 0 : i32
    %c0_i32_0 = arith.constant 0 : i32
    %c0_i32_1 = arith.constant 0 : i32
    return %c0_i32, %c0_i32_0 : i32, i32
  }
  func.func @transform_13(%arg0: i32) -> (i32, i32) {
    %c0_i32 = arith.constant 0 : i32
    %c0_i32_0 = arith.constant 0 : i32
    %c0_i32_1 = arith.constant 0 : i32
    return %c0_i32, %c0_i32_0 : i32, i32
  }
  func.func @transform_14(%arg0: i32) -> (i32, i32) {
    %c0_i32 = arith.constant 0 : i32
    %c0_i32_0 = arith.constant 0 : i32
    %c0_i32_1 = arith.constant 0 : i32
    return %c0_i32, %c0_i32_0 : i32, i32
  }
  func.func @transform_15(%arg0: i32) -> (i32, i32) {
    %c0_i32 = arith.constant 0 : i32
    %c0_i32_0 = arith.constant 0 : i32
    %c0_i32_1 = arith.constant 0 : i32
    return %c0_i32, %c0_i32_0 : i32, i32
  }
  func.func @transform_16(%arg0: i32) -> (i32, i32) {
    %c0_i32 = arith.constant 0 : i32
    %c0_i32_0 = arith.constant 0 : i32
    %c0_i32_1 = arith.constant 0 : i32
    return %c0_i32, %c0_i32_0 : i32, i32
  }
  func.func @transform_17(%arg0: i32) -> (i32, i32) {
    %c0_i32 = arith.constant 0 : i32
    %c0_i32_0 = arith.constant 0 : i32
    %c0_i32_1 = arith.constant 0 : i32
    return %c0_i32, %c0_i32_0 : i32, i32
  }
}

</mosaic_0001>

<llo_original>
// kernel: _lambda_.1
$region0: #{_lambda_.1}
  #allocation0 [shape = 'u32[]', space=smem, size = 0x4, offset = 0x4, fixed_abs, tag = 'smem constant byte address 0x4 - core index']
  #allocation1 [shape = 'u32[144,128]{1,0:T(1,128)}', space=vmem, size = 0x12000, scoped, tag = 'internal scratch']
  %s0 = inlined_call_operand.vmem [shape: f32[2,200], index: 0, kind: input, shape index: {}]
  %s1 = inlined_call_operand.hbm [shape: f32[200,1080], index: 1, kind: input, shape index: {}]
  %s2 = inlined_call_operand.vmem [shape: f32[1,1080], index: 2, kind: input, shape index: {}]
  %s3 = inlined_call_operand.hbm [shape: f32[1080,105], index: 3, kind: input, shape index: {}]
  %s4 = inlined_call_operand.vmem [shape: f32[1,105], index: 4, kind: input, shape index: {}]
  %s5 = inlined_call_operand.vmem [shape: f32[105,70], index: 5, kind: input, shape index: {}]
  %s6 = inlined_call_operand.vmem [shape: f32[1,70], index: 6, kind: input, shape index: {}, may-alias: {6,8}]
  %s7 = inlined_call_operand.hbm [shape: f32[70,70], index: 7, kind: input, shape index: {}]
  %s8 = inlined_call_operand.vmem [shape: f32[1,70], index: 8, kind: input, shape index: {}, may-alias: {6,8}]
  %s9 = inlined_call_operand.hbm [shape: f32[70,128], index: 9, kind: input, shape index: {}]
  %s10 = inlined_call_operand.vmem [shape: f32[1,128], index: 10, kind: input, shape index: {}, may-alias: {10,12}]
  %s11 = inlined_call_operand.hbm [shape: f32[70,128], index: 11, kind: input, shape index: {}]
  %s12 = inlined_call_operand.vmem [shape: f32[1,128], index: 12, kind: input, shape index: {}, may-alias: {10,12}]
  %s13 = inlined_call_operand.vmem [shape: f32[128,10], index: 13, kind: input, shape index: {}]
  %s14 = inlined_call_operand.vmem [shape: f32[1,10], index: 14, kind: input, shape index: {}]
  %s15 = inlined_call_operand.hbm [shape: f32[2,128], index: 15, kind: output, shape index: {0}]
  %s16 = inlined_call_operand.hbm [shape: f32[2,128], index: 16, kind: output, shape index: {1}]
  %s17 = inlined_call_operand.hbm [shape: f32[2,10], index: 17, kind: output, shape index: {2}]
  %18 = xla_tuple %s15, %s16, %s17
  %s19 = sld [smem:[#allocation0]]
  $region106: #{_lambda_.1} parent=0
    _
  %s21 = ssub.s32 1, %s19
  %s22 = scalar_select 0, %s21, %s19
  $region1: #{_lambda_.1} parent=0
    #allocation2 [shape = 'u8[921600]{0}', space=vmem, size = 0xe1000, scoped, tag = 'input window, operand 1, single buffered']
    #allocation3 [shape = 's32[1]{0}', space=sflag, size = 0x4, scoped, tag = 'scoped memory for _lambda_.1']
    #allocation4 [shape = 's32[1]{0}', space=sflag, size = 0x4, scoped, tag = 'scoped memory for _lambda_.1']
    #allocation5 [shape = 'u8[552960]{0}', space=vmem, size = 0x87000, scoped, tag = 'input window, operand 3, single buffered']
    #allocation6 [shape = 's32[1]{0}', space=sflag, size = 0x4, scoped, tag = 'scoped memory for _lambda_.1']
    #allocation7 [shape = 'u8[36864]{0}', space=vmem, size = 0x9000, scoped, tag = 'input window, operand 7, single buffered']
    #allocation8 [shape = 'u8[36864]{0}', space=vmem, size = 0x9000, scoped, tag = 'input window, operand 9, single buffered']
    #allocation9 [shape = 's32[1]{0}', space=sflag, size = 0x4, scoped, tag = 'scoped memory for _lambda_.1']
    #allocation10 [shape = 'u8[36864]{0}', space=vmem, size = 0x9000, scoped, tag = 'input window, operand 11, single buffered']
    #allocation11 [shape = 'u8[1024]{0}', space=vmem, size = 0x400, scoped, tag = 'output window, operand 0, single buffered']
    #allocation12 [shape = 'u8[1024]{0}', space=vmem, size = 0x400, scoped, tag = 'output window, operand 1, single buffered']
    #allocation13 [shape = 's32[1]{0}', space=sflag, size = 0x4, scoped, tag = 'scoped memory for _lambda_.1']
    #allocation14 [shape = 'u8[1024]{0}', space=vmem, size = 0x400, scoped, tag = 'output window, operand 2, single buffered']
    %23 = vsyncpa [#allocation3], 0
    %24 = vsyncpa [#allocation6], 0
    %25 = vsyncpa [#allocation9], 0
    %26 = vsyncpa [#allocation4], 0
    %27 = vsyncpa [#allocation13], 0
    // Predicated region
    $region2: #{_lambda_.1} parent=1 // pred_check
      _
    $region3: #{_lambda_.1} parent=1 // pred_check_branch
      %29 = sbr.rel (0) target = $region5
    $region4: #{_lambda_.1} parent=1 // pred_region
      _
    $region5: #{_lambda_.1} parent=1 // pred_fallthru
      _
    // Predicated region
    $region6: #{_lambda_.1} parent=1 // pred_check
      _
    $region7: #{_lambda_.1} parent=1 // pred_check_branch
      %31 = sbr.rel (0) target = $region9
    $region8: #{_lambda_.1} parent=1 // pred_region
      %s33 = ssub.s32 28800, 28800
      %34 = vsyncadd [#allocation3], %s33
      %s35 = sshll.u32 [#allocation2], 4
      %s36 = int_to_ptr.vmem [resolvable:$true] %s35
      %41 = dma.hbm_to_vmem [thread:$0]  %s1, 28800, %s36, [#allocation3], 1152, 1152, 72
    $region9: #{_lambda_.1} parent=1 // pred_fallthru
      _
    // Predicated region
    $region10: #{_lambda_.1} parent=1 // pred_check
      _
    $region11: #{_lambda_.1} parent=1 // pred_check_branch
      %43 = sbr.rel (0) target = $region13
    $region12: #{_lambda_.1} parent=1 // pred_region
      _
    $region13: #{_lambda_.1} parent=1 // pred_fallthru
      _
    // Predicated region
    $region14: #{_lambda_.1} parent=1 // pred_check
      _
    $region15: #{_lambda_.1} parent=1 // pred_check_branch
      %45 = sbr.rel (0) target = $region17
    $region16: #{_lambda_.1} parent=1 // pred_region
      %s47 = ssub.s32 17280, 17280
      %48 = vsyncadd [#allocation6], %s47
      %s49 = sshll.u32 [#allocation5], 4
      %s50 = int_to_ptr.vmem [resolvable:$true] %s49
      %55 = dma.hbm_to_vmem [thread:$0]  %s3, 17280, %s50, [#allocation6], 128, 128, 8
    $region17: #{_lambda_.1} parent=1 // pred_fallthru
      _
    // Predicated region
    $region18: #{_lambda_.1} parent=1 // pred_check
      _
    $region19: #{_lambda_.1} parent=1 // pred_check_branch
      %57 = sbr.rel (0) target = $region21
    $region20: #{_lambda_.1} parent=1 // pred_region
      _
    $region21: #{_lambda_.1} parent=1 // pred_fallthru
      _
    // Predicated region
    $region22: #{_lambda_.1} parent=1 // pred_check
      _
    $region23: #{_lambda_.1} parent=1 // pred_check_branch
      %59 = sbr.rel (0) target = $region25
    $region24: #{_lambda_.1} parent=1 // pred_region
      _
    $region25: #{_lambda_.1} parent=1 // pred_fallthru
      _
    // Predicated region
    $region26: #{_lambda_.1} parent=1 // pred_check
      _
    $region27: #{_lambda_.1} parent=1 // pred_check_branch
      %61 = sbr.rel (0) target = $region29
    $region28: #{_lambda_.1} parent=1 // pred_region
      _
    $region29: #{_lambda_.1} parent=1 // pred_fallthru
      _
    // Predicated region
    $region30: #{_lambda_.1} parent=1 // pred_check
      _
    $region31: #{_lambda_.1} parent=1 // pred_check_branch
      %63 = sbr.rel (0) target = $region33
    $region32: #{_lambda_.1} parent=1 // pred_region
      %s65 = ssub.s32 1152, 1152
      %66 = vsyncadd [#allocation6], %s65
      %s67 = sshll.u32 [#allocation7], 4
      %s68 = int_to_ptr.vmem [resolvable:$true] %s67
      %73 = dma.hbm_to_vmem [thread:$0]  %s7, 1152, %s68, [#allocation6], 128, 128, 8
    $region33: #{_lambda_.1} parent=1 // pred_fallthru
      _
    // Predicated region
    $region34: #{_lambda_.1} parent=1 // pred_check
      _
    $region35: #{_lambda_.1} parent=1 // pred_check_branch
      %75 = sbr.rel (0) target = $region37
    $region36: #{_lambda_.1} parent=1 // pred_region
      _
    $region37: #{_lambda_.1} parent=1 // pred_fallthru
      _
    // Predicated region
    $region38: #{_lambda_.1} parent=1 // pred_check
      _
    $region39: #{_lambda_.1} parent=1 // pred_check_branch
      %77 = sbr.rel (0) target = $region41
    $region40: #{_lambda_.1} parent=1 // pred_region
      %s79 = ssub.s32 1152, 1152
      %80 = vsyncadd [#allocation9], %s79
      %s81 = sshll.u32 [#allocation8], 4
      %s82 = int_to_ptr.vmem [resolvable:$true] %s81
      %87 = dma.hbm_to_vmem [thread:$0]  %s9, 1152, %s82, [#allocation9], 128, 128, 8
    $region41: #{_lambda_.1} parent=1 // pred_fallthru
      _
    // Predicated region
    $region42: #{_lambda_.1} parent=1 // pred_check
      _
    $region43: #{_lambda_.1} parent=1 // pred_check_branch
      %89 = sbr.rel (0) target = $region45
    $region44: #{_lambda_.1} parent=1 // pred_region
      _
    $region45: #{_lambda_.1} parent=1 // pred_fallthru
      _
    // Predicated region
    $region46: #{_lambda_.1} parent=1 // pred_check
      _
    $region47: #{_lambda_.1} parent=1 // pred_check_branch
      %91 = sbr.rel (0) target = $region49
    $region48: #{_lambda_.1} parent=1 // pred_region
      %s93 = ssub.s32 1152, 1152
      %94 = vsyncadd [#allocation9], %s93
      %s95 = sshll.u32 [#allocation10], 4
      %s96 = int_to_ptr.vmem [resolvable:$true] %s95
      %101 = dma.hbm_to_vmem [thread:$0]  %s11, 1152, %s96, [#allocation9], 128, 128, 8
    $region49: #{_lambda_.1} parent=1 // pred_fallthru
      _
    // Predicated region
    $region50: #{_lambda_.1} parent=1 // pred_check
      _
    $region51: #{_lambda_.1} parent=1 // pred_check_branch
      %103 = sbr.rel (0) target = $region53
    $region52: #{_lambda_.1} parent=1 // pred_region
      _
    $region53: #{_lambda_.1} parent=1 // pred_fallthru
      _
    // Predicated region
    $region54: #{_lambda_.1} parent=1 // pred_check
      _
    $region55: #{_lambda_.1} parent=1 // pred_check_branch
      %105 = sbr.rel (0) target = $region57
    $region56: #{_lambda_.1} parent=1 // pred_region
      _
    $region57: #{_lambda_.1} parent=1 // pred_fallthru
      _
    // Predicated region
    $region58: #{_lambda_.1} parent=1 // pred_check
      _
    $region59: #{_lambda_.1} parent=1 // pred_check_branch
      %107 = sbr.rel (0) target = $region61
    $region60: #{_lambda_.1} parent=1 // pred_region
      _
    $region61: #{_lambda_.1} parent=1 // pred_fallthru
      _
    // Predicated region
    $region62: #{_lambda_.1} parent=1 // pred_check
      _
    $region63: #{_lambda_.1} parent=1 // pred_check_branch
      %109 = sbr.rel (0) target = $region65
    $region64: #{_lambda_.1} parent=1 // pred_region
      %110 = dma.done [#allocation3], 28800
    $region65: #{_lambda_.1} parent=1 // pred_fallthru
      _
    // Predicated region
    $region66: #{_lambda_.1} parent=1 // pred_check
      _
    $region67: #{_lambda_.1} parent=1 // pred_check_branch
      %112 = sbr.rel (0) target = $region69
    $region68: #{_lambda_.1} parent=1 // pred_region
      %113 = dma.done [#allocation6], 17280
    $region69: #{_lambda_.1} parent=1 // pred_fallthru
      _
    // Predicated region
    $region70: #{_lambda_.1} parent=1 // pred_check
      _
    $region71: #{_lambda_.1} parent=1 // pred_check_branch
      %115 = sbr.rel (0) target = $region73
    $region72: #{_lambda_.1} parent=1 // pred_region
      %116 = dma.done [#allocation6], 1152
    $region73: #{_lambda_.1} parent=1 // pred_fallthru
      _
    // Predicated region
    $region74: #{_lambda_.1} parent=1 // pred_check
      _
    $region75: #{_lambda_.1} parent=1 // pred_check_branch
      %118 = sbr.rel (0) target = $region77
    $region76: #{_lambda_.1} parent=1 // pred_region
      %119 = dma.done [#allocation9], 1152
    $region77: #{_lambda_.1} parent=1 // pred_fallthru
      _
    // Predicated region
    $region78: #{_lambda_.1} parent=1 // pred_check
      _
    $region79: #{_lambda_.1} parent=1 // pred_check_branch
      %121 = sbr.rel (0) target = $region81
    $region80: #{_lambda_.1} parent=1 // pred_region
      %122 = dma.done [#allocation9], 1152
    $region81: #{_lambda_.1} parent=1 // pred_fallthru
      _
    %v123 = vld [vmem:[%s0] sm:$0xf]
    %v124 = vld [vmem:[#allocation2] sm:$0xff]
    %v125 = vld [vmem:[#allocation2 + $0x8] sm:$0xff]
    %v126 = vld [vmem:[#allocation2 + $0x10] sm:$0xff]
    %v127 = vld [vmem:[#allocation2 + $0x18] sm:$0xff]
    %v128 = vld [vmem:[#allocation2 + $0x20] sm:$0xff]
    %v129 = vld [vmem:[#allocation2 + $0x28] sm:$0xff]
    %v130 = vld [vmem:[#allocation2 + $0x30] sm:$0xff]
    %v131 = vld [vmem:[#allocation2 + $0x38] sm:$0xff]
    %v132 = vld [vmem:[#allocation2 + $0x40] sm:$0xff]
    %v133 = vld [vmem:[#allocation2 + $0x48] sm:$0xff]
    %v134 = vld [vmem:[#allocation2 + $0x50] sm:$0xff]
    %v135 = vld [vmem:[#allocation2 + $0x58] sm:$0xff]
    %v136 = vld [vmem:[#allocation2 + $0x60] sm:$0xff]
    %v137 = vld [vmem:[#allocation2 + $0x68] sm:$0xff]
    %v138 = vld [vmem:[#allocation2 + $0x70] sm:$0xff]
    %v139 = vld [vmem:[#allocation2 + $0x78] sm:$0xff]
    %v140 = vld [vmem:[#allocation2 + $0x80] sm:$0xff]
    %v141 = vld [vmem:[#allocation2 + $0x88] sm:$0xff]
    %v142 = vld [vmem:[#allocation2 + $0x90] sm:$0xff]
    %v143 = vld [vmem:[#allocation2 + $0x98] sm:$0xff]
    %v144 = vld [vmem:[#allocation2 + $0xa0] sm:$0xff]
    %v145 = vld [vmem:[#allocation2 + $0xa8] sm:$0xff]
    %v146 = vld [vmem:[#allocation2 + $0xb0] sm:$0xff]
    %v147 = vld [vmem:[#allocation2 + $0xb8] sm:$0xff]
    %v148 = vld [vmem:[#allocation2 + $0xc0] sm:$0xff]
    %v149 = vld [vmem:[#allocation2 + $0xc8] sm:$0xff]
    %v150 = vld [vmem:[#allocation2 + $0xd0] sm:$0xff]
    %v151 = vld [vmem:[#allocation2 + $0xd8] sm:$0xff]
    %v152 = vld [vmem:[#allocation2 + $0xe0] sm:$0xff]
    %v153 = vld [vmem:[#allocation2 + $0xe8] sm:$0xff]
    %v154 = vld [vmem:[#allocation2 + $0xf0] sm:$0xff]
    %v155 = vld [vmem:[#allocation2 + $0xf8] sm:$0xff]
    %v156 = vld [vmem:[#allocation2 + $0x100] sm:$0xff]
    %v157 = vld [vmem:[#allocation2 + $0x108] sm:$0xff]
    %v158 = vld [vmem:[#allocation2 + $0x110] sm:$0xff]
    %v159 = vld [vmem:[#allocation2 + $0x118] sm:$0xff]
    %v160 = vld [vmem:[#allocation2 + $0x120] sm:$0xff]
    %v161 = vld [vmem:[#allocation2 + $0x128] sm:$0xff]
    %v162 = vld [vmem:[#allocation2 + $0x130] sm:$0xff]
    %v163 = vld [vmem:[#allocation2 + $0x138] sm:$0xff]
    %v164 = vld [vmem:[#allocation2 + $0x140] sm:$0xff]
    %v165 = vld [vmem:[#allocation2 + $0x148] sm:$0xff]
    %v166 = vld [vmem:[#allocation2 + $0x150] sm:$0xff]
    %v167 = vld [vmem:[#allocation2 + $0x158] sm:$0xff]
    %v168 = vld [vmem:[#allocation2 + $0x160] sm:$0xff]
    %v169 = vld [vmem:[#allocation2 + $0x168] sm:$0xff]
    %v170 = vld [vmem:[#allocation2 + $0x170] sm:$0xff]
    %v171 = vld [vmem:[#allocation2 + $0x178] sm:$0xff]
    %v172 = vld [vmem:[#allocation2 + $0x180] sm:$0xff]
    %v173 = vld [vmem:[#allocation2 + $0x188] sm:$0xff]
    %v174 = vld [vmem:[#allocation2 + $0x190] sm:$0xff]
    %v175 = vld [vmem:[#allocation2 + $0x198] sm:$0xff]
    %v176 = vld [vmem:[#allocation2 + $0x1a0] sm:$0xff]
    %v177 = vld [vmem:[#allocation2 + $0x1a8] sm:$0xff]
    %v178 = vld [vmem:[#allocation2 + $0x1b0] sm:$0xff]
    %v179 = vld [vmem:[#allocation2 + $0x1b8] sm:$0xff]
    %v180 = vld [vmem:[#allocation2 + $0x1c0] sm:$0xff]
    %v181 = vld [vmem:[#allocation2 + $0x1c8] sm:$0xff]
    %v182 = vld [vmem:[#allocation2 + $0x1d0] sm:$0xff]
    %v183 = vld [vmem:[#allocation2 + $0x1d8] sm:$0xff]
    %v184 = vld [vmem:[#allocation2 + $0x1e0] sm:$0xff]
    %v185 = vld [vmem:[#allocation2 + $0x1e8] sm:$0xff]
    %v186 = vld [vmem:[#allocation2 + $0x1f0] sm:$0xff]
    %v187 = vld [vmem:[#allocation2 + $0x1f8] sm:$0xff]
    %v188 = vld [vmem:[#allocation2 + $0x200] sm:$0xff]
    %v189 = vld [vmem:[#allocation2 + $0x208] sm:$0xff]
    %v190 = vld [vmem:[#allocation2 + $0x210] sm:$0xff]
    %v191 = vld [vmem:[#allocation2 + $0x218] sm:$0xff]
    %v192 = vld [vmem:[#allocation2 + $0x220] sm:$0xff]
    %v193 = vld [vmem:[#allocation2 + $0x228] sm:$0xff]
    %v194 = vld [vmem:[#allocation2 + $0x230] sm:$0xff]
    %v195 = vld [vmem:[#allocation2 + $0x238] sm:$0xff]
    %v196 = vld [vmem:[#allocation2 + $0x240] sm:$0xff]
    %v197 = vld [vmem:[#allocation2 + $0x248] sm:$0xff]
    %v198 = vld [vmem:[#allocation2 + $0x250] sm:$0xff]
    %v199 = vld [vmem:[#allocation2 + $0x258] sm:$0xff]
    %v200 = vld [vmem:[#allocation2 + $0x260] sm:$0xff]
    %v201 = vld [vmem:[#allocation2 + $0x268] sm:$0xff]
    %v202 = vld [vmem:[#allocation2 + $0x270] sm:$0xff]
    %v203 = vld [vmem:[#allocation2 + $0x278] sm:$0xff]
    %v204 = vld [vmem:[#allocation2 + $0x280] sm:$0xff]
    %v205 = vld [vmem:[#allocation2 + $0x288] sm:$0xff]
    %v206 = vld [vmem:[#allocation2 + $0x290] sm:$0xff]
    %v207 = vld [vmem:[#allocation2 + $0x298] sm:$0xff]
    %v208 = vld [vmem:[#allocation2 + $0x2a0] sm:$0xff]
    %v209 = vld [vmem:[#allocation2 + $0x2a8] sm:$0xff]
    %v210 = vld [vmem:[#allocation2 + $0x2b0] sm:$0xff]
    %v211 = vld [vmem:[#allocation2 + $0x2b8] sm:$0xff]
    %v212 = vld [vmem:[#allocation2 + $0x2c0] sm:$0xff]
    %v213 = vld [vmem:[#allocation2 + $0x2c8] sm:$0xff]
    %v214 = vld [vmem:[#allocation2 + $0x2d0] sm:$0xff]
    %v215 = vld [vmem:[#allocation2 + $0x2d8] sm:$0xff]
    %v216 = vld [vmem:[#allocation2 + $0x2e0] sm:$0xff]
    %v217 = vld [vmem:[#allocation2 + $0x2e8] sm:$0xff]
    %v218 = vld [vmem:[#allocation2 + $0x2f0] sm:$0xff]
    %v219 = vld [vmem:[#allocation2 + $0x2f8] sm:$0xff]
    %v220 = vld [vmem:[#allocation2 + $0x300] sm:$0xff]
    %v221 = vld [vmem:[#allocation2 + $0x308] sm:$0xff]
    %v222 = vld [vmem:[#allocation2 + $0x310] sm:$0xff]
    %v223 = vld [vmem:[#allocation2 + $0x318] sm:$0xff]
    %v224 = vld [vmem:[#allocation2 + $0x320] sm:$0xff]
    %v225 = vld [vmem:[#allocation2 + $0x328] sm:$0xff]
    %v226 = vld [vmem:[#allocation2 + $0x330] sm:$0xff]
    %v227 = vld [vmem:[#allocation2 + $0x338] sm:$0xff]
    %v228 = vld [vmem:[#allocation2 + $0x340] sm:$0xff]
    %v229 = vld [vmem:[#allocation2 + $0x348] sm:$0xff]
    %v230 = vld [vmem:[#allocation2 + $0x350] sm:$0xff]
    %v231 = vld [vmem:[#allocation2 + $0x358] sm:$0xff]
    %v232 = vld [vmem:[#allocation2 + $0x360] sm:$0xff]
    %v233 = vld [vmem:[#allocation2 + $0x368] sm:$0xff]
    %v234 = vld [vmem:[#allocation2 + $0x370] sm:$0xff]
    %v235 = vld [vmem:[#allocation2 + $0x378] sm:$0xff]
    %v236 = vld [vmem:[#allocation2 + $0x380] sm:$0xff]
    %v237 = vld [vmem:[#allocation2 + $0x388] sm:$0xff]
    %v238 = vld [vmem:[#allocation2 + $0x390] sm:$0xff]
    %v239 = vld [vmem:[#allocation2 + $0x398] sm:$0xff]
    %v240 = vld [vmem:[#allocation2 + $0x3a0] sm:$0xff]
    %v241 = vld [vmem:[#allocation2 + $0x3a8] sm:$0xff]
    %v242 = vld [vmem:[#allocation2 + $0x3b0] sm:$0xff]
    %v243 = vld [vmem:[#allocation2 + $0x3b8] sm:$0xff]
    %v244 = vld [vmem:[#allocation2 + $0x3c0] sm:$0xff]
    %v245 = vld [vmem:[#allocation2 + $0x3c8] sm:$0xff]
    %v246 = vld [vmem:[#allocation2 + $0x3d0] sm:$0xff]
    %v247 = vld [vmem:[#allocation2 + $0x3d8] sm:$0xff]
    %v248 = vld [vmem:[#allocation2 + $0x3e0] sm:$0xff]
    %v249 = vld [vmem:[#allocation2 + $0x3e8] sm:$0xff]
    %v250 = vld [vmem:[#allocation2 + $0x3f0] sm:$0xff]
    %v251 = vld [vmem:[#allocation2 + $0x3f8] sm:$0xff]
    %v252 = vld [vmem:[#allocation2 + $0x400] sm:$0xff]
    %v253 = vld [vmem:[#allocation2 + $0x408] sm:$0xff]
    %v254 = vld [vmem:[#allocation2 + $0x410] sm:$0xff]
    %v255 = vld [vmem:[#allocation2 + $0x418] sm:$0xff]
    %v256 = vld [vmem:[#allocation2 + $0x420] sm:$0xff]
    %v257 = vld [vmem:[#allocation2 + $0x428] sm:$0xff]
    %v258 = vld [vmem:[#allocation2 + $0x430] sm:$0xff]
    %v259 = vld [vmem:[#allocation2 + $0x438] sm:$0xff]
    %v260 = vld [vmem:[#allocation2 + $0x440] sm:$0xff]
    %v261 = vld [vmem:[#allocation2 + $0x448] sm:$0xff]
    %v262 = vld [vmem:[#allocation2 + $0x450] sm:$0xff]
    %v263 = vld [vmem:[#allocation2 + $0x458] sm:$0xff]
    %v264 = vld [vmem:[#allocation2 + $0x460] sm:$0xff]
    %v265 = vld [vmem:[#allocation2 + $0x468] sm:$0xff]
    %v266 = vld [vmem:[#allocation2 + $0x470] sm:$0xff]
    %v267 = vld [vmem:[#allocation2 + $0x478] sm:$0xff]
    %v268 = vld [vmem:[#allocation2 + $0x480] sm:$0xff]
    %v269 = vld [vmem:[#allocation2 + $0x488] sm:$0xff]
    %v270 = vld [vmem:[#allocation2 + $0x490] sm:$0xff]
    %v271 = vld [vmem:[#allocation2 + $0x498] sm:$0xff]
    %v272 = vld [vmem:[#allocation2 + $0x4a0] sm:$0xff]
    %v273 = vld [vmem:[#allocation2 + $0x4a8] sm:$0xff]
    %v274 = vld [vmem:[#allocation2 + $0x4b0] sm:$0xff]
    %v275 = vld [vmem:[#allocation2 + $0x4b8] sm:$0xff]
    %v276 = vld [vmem:[#allocation2 + $0x4c0] sm:$0xff]
    %v277 = vld [vmem:[#allocation2 + $0x4c8] sm:$0xff]
    %v278 = vld [vmem:[#allocation2 + $0x4d0] sm:$0xff]
    %v279 = vld [vmem:[#allocation2 + $0x4d8] sm:$0xff]
    %v280 = vld [vmem:[#allocation2 + $0x4e0] sm:$0xff]
    %v281 = vld [vmem:[#allocation2 + $0x4e8] sm:$0xff]
    %v282 = vld [vmem:[#allocation2 + $0x4f0] sm:$0xff]
    %v283 = vld [vmem:[#allocation2 + $0x4f8] sm:$0xff]
    %v284 = vld [vmem:[#allocation2 + $0x500] sm:$0xff]
    %v285 = vld [vmem:[#allocation2 + $0x508] sm:$0xff]
    %v286 = vld [vmem:[#allocation2 + $0x510] sm:$0xff]
    %v287 = vld [vmem:[#allocation2 + $0x518] sm:$0xff]
    %v288 = vld [vmem:[#allocation2 + $0x520] sm:$0xff]
    %v289 = vld [vmem:[#allocation2 + $0x528] sm:$0xff]
    %v290 = vld [vmem:[#allocation2 + $0x530] sm:$0xff]
    %v291 = vld [vmem:[#allocation2 + $0x538] sm:$0xff]
    %v292 = vld [vmem:[#allocation2 + $0x540] sm:$0xff]
    %v293 = vld [vmem:[#allocation2 + $0x548] sm:$0xff]
    %v294 = vld [vmem:[#allocation2 + $0x550] sm:$0xff]
    %v295 = vld [vmem:[#allocation2 + $0x558] sm:$0xff]
    %v296 = vld [vmem:[#allocation2 + $0x560] sm:$0xff]
    %v297 = vld [vmem:[#allocation2 + $0x568] sm:$0xff]
    %v298 = vld [vmem:[#allocation2 + $0x570] sm:$0xff]
    %v299 = vld [vmem:[#allocation2 + $0x578] sm:$0xff]
    %v300 = vld [vmem:[#allocation2 + $0x580] sm:$0xff]
    %v301 = vld [vmem:[#allocation2 + $0x588] sm:$0xff]
    %v302 = vld [vmem:[#allocation2 + $0x590] sm:$0xff]
    %v303 = vld [vmem:[#allocation2 + $0x598] sm:$0xff]
    %v304 = vld [vmem:[#allocation2 + $0x5a0] sm:$0xff]
    %v305 = vld [vmem:[#allocation2 + $0x5a8] sm:$0xff]
    %v306 = vld [vmem:[#allocation2 + $0x5b0] sm:$0xff]
    %v307 = vld [vmem:[#allocation2 + $0x5b8] sm:$0xff]
    %v308 = vld [vmem:[#allocation2 + $0x5c0] sm:$0xff]
    %v309 = vld [vmem:[#allocation2 + $0x5c8] sm:$0xff]
    %v310 = vld [vmem:[#allocation2 + $0x5d0] sm:$0xff]
    %v311 = vld [vmem:[#allocation2 + $0x5d8] sm:$0xff]
    %v312 = vld [vmem:[#allocation2 + $0x5e0] sm:$0xff]
    %v313 = vld [vmem:[#allocation2 + $0x5e8] sm:$0xff]
    %v314 = vld [vmem:[#allocation2 + $0x5f0] sm:$0xff]
    %v315 = vld [vmem:[#allocation2 + $0x5f8] sm:$0xff]
    %v316 = vld [vmem:[#allocation2 + $0x600] sm:$0xff]
    %v317 = vld [vmem:[#allocation2 + $0x608] sm:$0xff]
    %v318 = vld [vmem:[#allocation2 + $0x610] sm:$0xff]
    %v319 = vld [vmem:[#allocation2 + $0x618] sm:$0xff]
    %v320 = vld [vmem:[#allocation2 + $0x620] sm:$0xff]
    %v321 = vld [vmem:[#allocation2 + $0x628] sm:$0xff]
    %v322 = vld [vmem:[#allocation2 + $0x630] sm:$0xff]
    %v323 = vld [vmem:[#allocation2 + $0x638] sm:$0xff]
    %v324 = vld [vmem:[#allocation2 + $0x640] sm:$0xff]
    %v325 = vld [vmem:[#allocation2 + $0x648] sm:$0xff]
    %v326 = vld [vmem:[#allocation2 + $0x650] sm:$0xff]
    %v327 = vld [vmem:[#allocation2 + $0x658] sm:$0xff]
    %v328 = vld [vmem:[#allocation2 + $0x660] sm:$0xff]
    %v329 = vld [vmem:[#allocation2 + $0x668] sm:$0xff]
    %v330 = vld [vmem:[#allocation2 + $0x670] sm:$0xff]
    %v331 = vld [vmem:[#allocation2 + $0x678] sm:$0xff]
    %v332 = vld [vmem:[#allocation2 + $0x680] sm:$0xff]
    %v333 = vld [vmem:[#allocation2 + $0x688] sm:$0xff]
    %v334 = vld [vmem:[#allocation2 + $0x690] sm:$0xff]
    %v335 = vld [vmem:[#allocation2 + $0x698] sm:$0xff]
    %v336 = vld [vmem:[#allocation2 + $0x6a0] sm:$0xff]
    %v337 = vld [vmem:[#allocation2 + $0x6a8] sm:$0xff]
    %v338 = vld [vmem:[#allocation2 + $0x6b0] sm:$0xff]
    %v339 = vld [vmem:[#allocation2 + $0x6b8] sm:$0xff]
    %v340 = vld [vmem:[#allocation2 + $0x6c0] sm:$0xff]
    %v341 = vld [vmem:[#allocation2 + $0x6c8] sm:$0xff]
    %v342 = vld [vmem:[#allocation2 + $0x6d0] sm:$0xff]
    %v343 = vld [vmem:[#allocation2 + $0x6d8] sm:$0xff]
    %v344 = vld [vmem:[#allocation2 + $0x6e0] sm:$0xff]
    %v345 = vld [vmem:[#allocation2 + $0x6e8] sm:$0xff]
    %v346 = vld [vmem:[#allocation2 + $0x6f0] sm:$0xff]
    %v347 = vld [vmem:[#allocation2 + $0x6f8] sm:$0xff]
    %v348 = vld [vmem:[#allocation2 + $0x700] sm:$0xff]
    %v349 = vld [vmem:[%s2] sm:$0xff]
    %v350 = vld [vmem:[%s2 + $0x8] sm:$0x1]
    %v353 = vlaneseq
    %v354 = vshrl.u32 %v353, 7
    %v355 = vsub.s32 0, %v354
    %v356 = vrot.slane %v349, %v355
    %v357 = vlaneseq
    %v358 = vshrl.u32 %v357, 7
    %v359 = vsub.s32 1, %v358
    %v360 = vrot.slane %v349, %v359
    %v361 = vlaneseq
    %v362 = vshrl.u32 %v361, 7
    %v363 = vsub.s32 2, %v362
    %v364 = vrot.slane %v349, %v363
    %v365 = vlaneseq
    %v366 = vshrl.u32 %v365, 7
    %v367 = vsub.s32 3, %v366
    %v368 = vrot.slane %v349, %v367
    %v369 = vlaneseq
    %v370 = vshrl.u32 %v369, 7
    %v371 = vsub.s32 4, %v370
    %v372 = vrot.slane %v349, %v371
    %v373 = vlaneseq
    %v374 = vshrl.u32 %v373, 7
    %v375 = vsub.s32 5, %v374
    %v376 = vrot.slane %v349, %v375
    %v377 = vlaneseq
    %v378 = vshrl.u32 %v377, 7
    %v379 = vsub.s32 6, %v378
    %v380 = vrot.slane %v349, %v379
    %v381 = vlaneseq
    %v382 = vshrl.u32 %v381, 7
    %v383 = vsub.s32 7, %v382
    %v384 = vrot.slane %v349, %v383
    %v385 = vlaneseq
    %v386 = vshrl.u32 %v385, 7
    %v387 = vsub.s32 0, %v386
    %v388 = vrot.slane %v350, %v387
    %v400 = vunpack.c.l.s4 1983009808
    %v401 = vunpack.c.0.s8 %v400
    %v402 = vlaneseq
    %v403 = vshrl.u32 %v402, 7
    %v404 = vsub.s32 %v401, %v403
    %v405 = vrot.slane %v123, %v404
    %v406 = vcombine.high %v405, %v405
    %vm408 = vcmask 588800
    %v409 = vsel %vm408, %v406, 0
    %411 = vmatprep.subr.mxu0 %v125
    %412 = vmatpush1.msra.mxu0 %v124
    %413 = vmatprep.subr.mxu0 %v134
    %414 = vmatpush1.msra.mxu0 %v133
    %415 = vmatprep.subr.mxu0 %v143
    %416 = vmatpush1.msra.mxu0 %v142
    %417 = vmatprep.subr.mxu0 %v152
    %418 = vmatpush1.msra.mxu0 %v151
    %419 = vmatprep.subr.mxu0 %v161
    %420 = vmatpush1.msra.mxu0 %v160
    %421 = vmatprep.subr.mxu0 %v170
    %422 = vmatpush1.msra.mxu0 %v169
    %423 = vmatprep.subr.mxu0 %v179
    %424 = vmatpush1.msra.mxu0 %v178
    %425 = vmatprep.subr.mxu0 %v188
    %426 = vmatpush1.msra.mxu0 %v187
    %427 = vmatprep.subr.mxu0 %v197
    %428 = vmatpush1.msra.mxu0 %v196
    %429 = vmatprep.subr.mxu0 %v206
    %430 = vmatpush1.msra.mxu0 %v205
    %431 = vmatprep.subr.mxu0 %v215
    %432 = vmatpush1.msra.mxu0 %v214
    %433 = vmatprep.subr.mxu0 %v224
    %434 = vmatpush1.msra.mxu0 %v223
    %435 = vmatprep.subr.mxu0 %v233
    %436 = vmatpush1.msra.mxu0 %v232
    %437 = vmatprep.subr.mxu0 %v242
    %438 = vmatpush1.msra.mxu0 %v241
    %439 = vmatprep.subr.mxu0 %v251
    %440 = vmatpush1.msra.mxu0 %v250
    %441 = vmatprep.subr.mxu0 %v260
    %442 = vmatpush1.msra.mxu0 %v259
    %443 = vmatprep.subr.mxu0 %v269
    %444 = vmatpush1.msra.mxu0 %v268
    %445 = vmatprep.subr.mxu0 %v278
    %446 = vmatpush1.msra.mxu0 %v277
    %447 = vmatprep.subr.mxu0 %v287
    %448 = vmatpush1.msra.mxu0 %v286
    %449 = vmatprep.subr.mxu0 %v296
    %450 = vmatpush1.msra.mxu0 %v295
    %451 = vmatprep.subr.mxu0 %v305
    %452 = vmatpush1.msra.mxu0 %v304
    %453 = vmatprep.subr.mxu0 %v314
    %454 = vmatpush1.msra.mxu0 %v313
    %455 = vmatprep.subr.mxu0 %v323
    %456 = vmatpush1.msra.mxu0 %v322
    %457 = vmatprep.subr.mxu0 %v332
    %458 = vmatpush1.msra.mxu0 %v331
    %459 = vmatprep.subr.mxu0 %v341
    %460 = vmatpush1.msra.mxu0 %v340
    %461 = vmatprep.subr.mxu0 0.0
    %462 = vmatpush1.msra.mxu0 0.0
    %463 = vmatprep.subr.mxu0 0.0
    %464 = vmatpush1.msra.mxu0 0.0
    %465 = vmatprep.subr.mxu0 0.0
    %466 = vmatpush1.msra.mxu0 0.0
    %467 = vmatprep.subr.mxu0 0.0
    %468 = vmatpush1.msra.mxu0 0.0
    %469 = vmatprep.subr.mxu0 0.0
    %470 = vmatpush1.msra.mxu0 0.0
    %471 = vmatprep.subr.mxu0 0.0
    %472 = vmatpush1.msra.mxu0 0.0
    %473 = vmatprep.subr.mxu0 0.0
    %474 = vmatpush1.msra.mxu0 0.0
    %475 = vmatprep.mubr.f32.mxu0 %v409
    %476 = vmatmul.mubr.f32.gmra.mrb[0].mxu0 %v405
    %v477 = vpop.f32.mrb[0].mxu0
    %v478 = vadd.f32 %v356, %v477
    %v479 = vpop.f32.mrb[0].mxu0
    %v480 = vadd.f32 %v360, %v479
    %481 = vdwg.mxu0
    %482 = vmatprep.subr.mxu0 %v127
    %483 = vmatpush1.msra.mxu0 %v126
    %484 = vmatprep.subr.mxu0 %v136
    %485 = vmatpush1.msra.mxu0 %v135
    %486 = vmatprep.subr.mxu0 %v145
    %487 = vmatpush1.msra.mxu0 %v144
    %488 = vmatprep.subr.mxu0 %v154
    %489 = vmatpush1.msra.mxu0 %v153
    %490 = vmatprep.subr.mxu0 %v163
    %491 = vmatpush1.msra.mxu0 %v162
    %492 = vmatprep.subr.mxu0 %v172
    %493 = vmatpush1.msra.mxu0 %v171
    %494 = vmatprep.subr.mxu0 %v181
    %495 = vmatpush1.msra.mxu0 %v180
    %496 = vmatprep.subr.mxu0 %v190
    %497 = vmatpush1.msra.mxu0 %v189
    %498 = vmatprep.subr.mxu0 %v199
    %499 = vmatpush1.msra.mxu0 %v198
    %500 = vmatprep.subr.mxu0 %v208
    %501 = vmatpush1.msra.mxu0 %v207
    %502 = vmatprep.subr.mxu0 %v217
    %503 = vmatpush1.msra.mxu0 %v216
    %504 = vmatprep.subr.mxu0 %v226
    %505 = vmatpush1.msra.mxu0 %v225
    %506 = vmatprep.subr.mxu0 %v235
    %507 = vmatpush1.msra.mxu0 %v234
    %508 = vmatprep.subr.mxu0 %v244
    %509 = vmatpush1.msra.mxu0 %v243
    %510 = vmatprep.subr.mxu0 %v253
    %511 = vmatpush1.msra.mxu0 %v252
    %512 = vmatprep.subr.mxu0 %v262
    %513 = vmatpush1.msra.mxu0 %v261
    %514 = vmatprep.subr.mxu0 %v271
    %515 = vmatpush1.msra.mxu0 %v270
    %516 = vmatprep.subr.mxu0 %v280
    %517 = vmatpush1.msra.mxu0 %v279
    %518 = vmatprep.subr.mxu0 %v289
    %519 = vmatpush1.msra.mxu0 %v288
    %520 = vmatprep.subr.mxu0 %v298
    %521 = vmatpush1.msra.mxu0 %v297
    %522 = vmatprep.subr.mxu0 %v307
    %523 = vmatpush1.msra.mxu0 %v306
    %524 = vmatprep.subr.mxu0 %v316
    %525 = vmatpush1.msra.mxu0 %v315
    %526 = vmatprep.subr.mxu0 %v325
    %527 = vmatpush1.msra.mxu0 %v324
    %528 = vmatprep.subr.mxu0 %v334
    %529 = vmatpush1.msra.mxu0 %v333
    %530 = vmatprep.subr.mxu0 %v343
    %531 = vmatpush1.msra.mxu0 %v342
    %532 = vmatprep.subr.mxu0 0.0
    %533 = vmatpush1.msra.mxu0 0.0
    %534 = vmatprep.subr.mxu0 0.0
    %535 = vmatpush1.msra.mxu0 0.0
    %536 = vmatprep.subr.mxu0 0.0
    %537 = vmatpush1.msra.mxu0 0.0
    %538 = vmatprep.subr.mxu0 0.0
    %539 = vmatpush1.msra.mxu0 0.0
    %540 = vmatprep.subr.mxu0 0.0
    %541 = vmatpush1.msra.mxu0 0.0
    %542 = vmatprep.subr.mxu0 0.0
    %543 = vmatpush1.msra.mxu0 0.0
    %544 = vmatprep.subr.mxu0 0.0
    %545 = vmatpush1.msra.mxu0 0.0
    %546 = vmatprep.mubr.f32.mxu0 %v409
    %547 = vmatmul.mubr.f32.gmra.mrb[0].mxu0 %v405
    %v548 = vpop.f32.mrb[0].mxu0
    %v549 = vadd.f32 %v364, %v548
    %v550 = vpop.f32.mrb[0].mxu0
    %v551 = vadd.f32 %v368, %v550
    %552 = vdwg.mxu0
    %553 = vmatprep.subr.mxu0 %v129
    %554 = vmatpush1.msra.mxu0 %v128
    %555 = vmatprep.subr.mxu0 %v138
    %556 = vmatpush1.msra.mxu0 %v137
    %557 = vmatprep.subr.mxu0 %v147
    %558 = vmatpush1.msra.mxu0 %v146
    %559 = vmatprep.subr.mxu0 %v156
    %560 = vmatpush1.msra.mxu0 %v155
    %561 = vmatprep.subr.mxu0 %v165
    %562 = vmatpush1.msra.mxu0 %v164
    %563 = vmatprep.subr.mxu0 %v174
    %564 = vmatpush1.msra.mxu0 %v173
    %565 = vmatprep.subr.mxu0 %v183
    %566 = vmatpush1.msra.mxu0 %v182
    %567 = vmatprep.subr.mxu0 %v192
    %568 = vmatpush1.msra.mxu0 %v191
    %569 = vmatprep.subr.mxu0 %v201
    %570 = vmatpush1.msra.mxu0 %v200
    %571 = vmatprep.subr.mxu0 %v210
    %572 = vmatpush1.msra.mxu0 %v209
    %573 = vmatprep.subr.mxu0 %v219
    %574 = vmatpush1.msra.mxu0 %v218
    %575 = vmatprep.subr.mxu0 %v228
    %576 = vmatpush1.msra.mxu0 %v227
    %577 = vmatprep.subr.mxu0 %v237
    %578 = vmatpush1.msra.mxu0 %v236
    %579 = vmatprep.subr.mxu0 %v246
    %580 = vmatpush1.msra.mxu0 %v245
    %581 = vmatprep.subr.mxu0 %v255
    %582 = vmatpush1.msra.mxu0 %v254
    %583 = vmatprep.subr.mxu0 %v264
    %584 = vmatpush1.msra.mxu0 %v263
    %585 = vmatprep.subr.mxu0 %v273
    %586 = vmatpush1.msra.mxu0 %v272
    %587 = vmatprep.subr.mxu0 %v282
    %588 = vmatpush1.msra.mxu0 %v281
    %589 = vmatprep.subr.mxu0 %v291
    %590 = vmatpush1.msra.mxu0 %v290
    %591 = vmatprep.subr.mxu0 %v300
    %592 = vmatpush1.msra.mxu0 %v299
    %593 = vmatprep.subr.mxu0 %v309
    %594 = vmatpush1.msra.mxu0 %v308
    %595 = vmatprep.subr.mxu0 %v318
    %596 = vmatpush1.msra.mxu0 %v317
    %597 = vmatprep.subr.mxu0 %v327
    %598 = vmatpush1.msra.mxu0 %v326
    %599 = vmatprep.subr.mxu0 %v336
    %600 = vmatpush1.msra.mxu0 %v335
    %601 = vmatprep.subr.mxu0 %v345
    %602 = vmatpush1.msra.mxu0 %v344
    %603 = vmatprep.subr.mxu0 0.0
    %604 = vmatpush1.msra.mxu0 0.0
    %605 = vmatprep.subr.mxu0 0.0
    %606 = vmatpush1.msra.mxu0 0.0
    %607 = vmatprep.subr.mxu0 0.0
    %608 = vmatpush1.msra.mxu0 0.0
    %609 = vmatprep.subr.mxu0 0.0
    %610 = vmatpush1.msra.mxu0 0.0
    %611 = vmatprep.subr.mxu0 0.0
    %612 = vmatpush1.msra.mxu0 0.0
    %613 = vmatprep.subr.mxu0 0.0
    %614 = vmatpush1.msra.mxu0 0.0
    %615 = vmatprep.subr.mxu0 0.0
    %616 = vmatpush1.msra.mxu0 0.0
    %617 = vmatprep.mubr.f32.mxu0 %v409
    %618 = vmatmul.mubr.f32.gmra.mrb[0].mxu0 %v405
    %v619 = vpop.f32.mrb[0].mxu0
    %v620 = vadd.f32 %v372, %v619
    %v621 = vpop.f32.mrb[0].mxu0
    %v622 = vadd.f32 %v376, %v621
    %623 = vdwg.mxu0
    %624 = vmatprep.subr.mxu0 %v131
    %625 = vmatpush1.msra.mxu0 %v130
    %626 = vmatprep.subr.mxu0 %v140
    %627 = vmatpush1.msra.mxu0 %v139
    %628 = vmatprep.subr.mxu0 %v149
    %629 = vmatpush1.msra.mxu0 %v148
    %630 = vmatprep.subr.mxu0 %v158
    %631 = vmatpush1.msra.mxu0 %v157
    %632 = vmatprep.subr.mxu0 %v167
    %633 = vmatpush1.msra.mxu0 %v166
    %634 = vmatprep.subr.mxu0 %v176
    %635 = vmatpush1.msra.mxu0 %v175
    %636 = vmatprep.subr.mxu0 %v185
    %637 = vmatpush1.msra.mxu0 %v184
    %638 = vmatprep.subr.mxu0 %v194
    %639 = vmatpush1.msra.mxu0 %v193
    %640 = vmatprep.subr.mxu0 %v203
    %641 = vmatpush1.msra.mxu0 %v202
    %642 = vmatprep.subr.mxu0 %v212
    %643 = vmatpush1.msra.mxu0 %v211
    %644 = vmatprep.subr.mxu0 %v221
    %645 = vmatpush1.msra.mxu0 %v220
    %646 = vmatprep.subr.mxu0 %v230
    %647 = vmatpush1.msra.mxu0 %v229
    %648 = vmatprep.subr.mxu0 %v239
    %649 = vmatpush1.msra.mxu0 %v238
    %650 = vmatprep.subr.mxu0 %v248
    %651 = vmatpush1.msra.mxu0 %v247
    %652 = vmatprep.subr.mxu0 %v257
    %653 = vmatpush1.msra.mxu0 %v256
    %654 = vmatprep.subr.mxu0 %v266
    %655 = vmatpush1.msra.mxu0 %v265
    %656 = vmatprep.subr.mxu0 %v275
    %657 = vmatpush1.msra.mxu0 %v274
    %658 = vmatprep.subr.mxu0 %v284
    %659 = vmatpush1.msra.mxu0 %v283
    %660 = vmatprep.subr.mxu0 %v293
    %661 = vmatpush1.msra.mxu0 %v292
    %662 = vmatprep.subr.mxu0 %v302
    %663 = vmatpush1.msra.mxu0 %v301
    %664 = vmatprep.subr.mxu0 %v311
    %665 = vmatpush1.msra.mxu0 %v310
    %666 = vmatprep.subr.mxu0 %v320
    %667 = vmatpush1.msra.mxu0 %v319
    %668 = vmatprep.subr.mxu0 %v329
    %669 = vmatpush1.msra.mxu0 %v328
    %670 = vmatprep.subr.mxu0 %v338
    %671 = vmatpush1.msra.mxu0 %v337
    %672 = vmatprep.subr.mxu0 %v347
    %673 = vmatpush1.msra.mxu0 %v346
    %674 = vmatprep.subr.mxu0 0.0
    %675 = vmatpush1.msra.mxu0 0.0
    %676 = vmatprep.subr.mxu0 0.0
    %677 = vmatpush1.msra.mxu0 0.0
    %678 = vmatprep.subr.mxu0 0.0
    %679 = vmatpush1.msra.mxu0 0.0
    %680 = vmatprep.subr.mxu0 0.0
    %681 = vmatpush1.msra.mxu0 0.0
    %682 = vmatprep.subr.mxu0 0.0
    %683 = vmatpush1.msra.mxu0 0.0
    %684 = vmatprep.subr.mxu0 0.0
    %685 = vmatpush1.msra.mxu0 0.0
    %686 = vmatprep.subr.mxu0 0.0
    %687 = vmatpush1.msra.mxu0 0.0
    %688 = vmatprep.mubr.f32.mxu0 %v409
    %689 = vmatmul.mubr.f32.gmra.mrb[0].mxu0 %v405
    %v690 = vpop.f32.mrb[0].mxu0
    %v691 = vadd.f32 %v380, %v690
    %v692 = vpop.f32.mrb[0].mxu0
    %v693 = vadd.f32 %v384, %v692
    %694 = vdwg.mxu0
    %695 = vmatprep.subr.mxu0 0.0
    %696 = vmatpush1.msra.mxu0 %v132
    %697 = vmatprep.subr.mxu0 0.0
    %698 = vmatpush1.msra.mxu0 %v141
    %699 = vmatprep.subr.mxu0 0.0
    %700 = vmatpush1.msra.mxu0 %v150
    %701 = vmatprep.subr.mxu0 0.0
    %702 = vmatpush1.msra.mxu0 %v159
    %703 = vmatprep.subr.mxu0 0.0
    %704 = vmatpush1.msra.mxu0 %v168
    %705 = vmatprep.subr.mxu0 0.0
    %706 = vmatpush1.msra.mxu0 %v177
    %707 = vmatprep.subr.mxu0 0.0
    %708 = vmatpush1.msra.mxu0 %v186
    %709 = vmatprep.subr.mxu0 0.0
    %710 = vmatpush1.msra.mxu0 %v195
    %711 = vmatprep.subr.mxu0 0.0
    %712 = vmatpush1.msra.mxu0 %v204
    %713 = vmatprep.subr.mxu0 0.0
    %714 = vmatpush1.msra.mxu0 %v213
    %715 = vmatprep.subr.mxu0 0.0
    %716 = vmatpush1.msra.mxu0 %v222
    %717 = vmatprep.subr.mxu0 0.0
    %718 = vmatpush1.msra.mxu0 %v231
    %719 = vmatprep.subr.mxu0 0.0
    %720 = vmatpush1.msra.mxu0 %v240
    %721 = vmatprep.subr.mxu0 0.0
    %722 = vmatpush1.msra.mxu0 %v249
    %723 = vmatprep.subr.mxu0 0.0
    %724 = vmatpush1.msra.mxu0 %v258
    %725 = vmatprep.subr.mxu0 0.0
    %726 = vmatpush1.msra.mxu0 %v267
    %727 = vmatprep.subr.mxu0 0.0
    %728 = vmatpush1.msra.mxu0 %v276
    %729 = vmatprep.subr.mxu0 0.0
    %730 = vmatpush1.msra.mxu0 %v285
    %731 = vmatprep.subr.mxu0 0.0
    %732 = vmatpush1.msra.mxu0 %v294
    %733 = vmatprep.subr.mxu0 0.0
    %734 = vmatpush1.msra.mxu0 %v303
    %735 = vmatprep.subr.mxu0 0.0
    %736 = vmatpush1.msra.mxu0 %v312
    %737 = vmatprep.subr.mxu0 0.0
    %738 = vmatpush1.msra.mxu0 %v321
    %739 = vmatprep.subr.mxu0 0.0
    %740 = vmatpush1.msra.mxu0 %v330
    %741 = vmatprep.subr.mxu0 0.0
    %742 = vmatpush1.msra.mxu0 %v339
    %743 = vmatprep.subr.mxu0 0.0
    %744 = vmatpush1.msra.mxu0 %v348
    %745 = vmatprep.subr.mxu0 0.0
    %746 = vmatpush1.msra.mxu0 0.0
    %747 = vmatprep.subr.mxu0 0.0
    %748 = vmatpush1.msra.mxu0 0.0
    %749 = vmatprep.subr.mxu0 0.0
    %750 = vmatpush1.msra.mxu0 0.0
    %751 = vmatprep.subr.mxu0 0.0
    %752 = vmatpush1.msra.mxu0 0.0
    %753 = vmatprep.subr.mxu0 0.0
    %754 = vmatpush1.msra.mxu0 0.0
    %755 = vmatprep.subr.mxu0 0.0
    %756 = vmatpush1.msra.mxu0 0.0
    %757 = vmatprep.subr.mxu0 0.0
    %758 = vmatpush1.msra.mxu0 0.0
    %759 = vmatprep.mubr.f32.mxu0 %v409
    %760 = vmatmul.mubr.f32.gmra.mrb[0].mxu0 %v405
    %v761 = vpop.f32.mrb[0].mxu0
    %v762 = vadd.f32 %v388, %v761
    %v763 = vpop.f32.mrb[0].mxu0
    %764 = vdwg.mxu0
    %v765 = vmax.f32 %v478, 0.0
    %v766 = vmax.f32 %v480, 0.0
    %v767 = vmax.f32 %v549, 0.0
    %v768 = vmax.f32 %v551, 0.0
    %v769 = vmax.f32 %v620, 0.0
    %v770 = vmax.f32 %v622, 0.0
    %v771 = vmax.f32 %v691, 0.0
    %v772 = vmax.f32 %v693, 0.0
    %v773 = vmax.f32 %v762, 0.0
    %v774 = vld [vmem:[#allocation5] sm:$0xff]
    %v775 = vld [vmem:[#allocation5 + $0x8] sm:$0xff]
    %v776 = vld [vmem:[#allocation5 + $0x10] sm:$0xff]
    %v777 = vld [vmem:[#allocation5 + $0x18] sm:$0xff]
    %v778 = vld [vmem:[#allocation5 + $0x20] sm:$0xff]
    %v779 = vld [vmem:[#allocation5 + $0x28] sm:$0xff]
    %v780 = vld [vmem:[#allocation5 + $0x30] sm:$0xff]
    %v781 = vld [vmem:[#allocation5 + $0x38] sm:$0xff]
    %v782 = vld [vmem:[#allocation5 + $0x40] sm:$0xff]
    %v783 = vld [vmem:[#allocation5 + $0x48] sm:$0xff]
    %v784 = vld [vmem:[#allocation5 + $0x50] sm:$0xff]
    %v785 = vld [vmem:[#allocation5 + $0x58] sm:$0xff]
    %v786 = vld [vmem:[#allocation5 + $0x60] sm:$0xff]
    %v787 = vld [vmem:[#allocation5 + $0x68] sm:$0xff]
    %v788 = vld [vmem:[#allocation5 + $0x70] sm:$0xff]
    %v789 = vld [vmem:[#allocation5 + $0x78] sm:$0xff]
    %v790 = vld [vmem:[#allocation5 + $0x80] sm:$0xff]
    %v791 = vld [vmem:[#allocation5 + $0x88] sm:$0xff]
    %v792 = vld [vmem:[#allocation5 + $0x90] sm:$0xff]
    %v793 = vld [vmem:[#allocation5 + $0x98] sm:$0xff]
    %v794 = vld [vmem:[#allocation5 + $0xa0] sm:$0xff]
    %v795 = vld [vmem:[#allocation5 + $0xa8] sm:$0xff]
    %v796 = vld [vmem:[#allocation5 + $0xb0] sm:$0xff]
    %v797 = vld [vmem:[#allocation5 + $0xb8] sm:$0xff]
    %v798 = vld [vmem:[#allocation5 + $0xc0] sm:$0xff]
    %v799 = vld [vmem:[#allocation5 + $0xc8] sm:$0xff]
    %v800 = vld [vmem:[#allocation5 + $0xd0] sm:$0xff]
    %v801 = vld [vmem:[#allocation5 + $0xd8] sm:$0xff]
    %v802 = vld [vmem:[#allocation5 + $0xe0] sm:$0xff]
    %v803 = vld [vmem:[#allocation5 + $0xe8] sm:$0xff]
    %v804 = vld [vmem:[#allocation5 + $0xf0] sm:$0xff]
    %v805 = vld [vmem:[#allocation5 + $0xf8] sm:$0xff]
    %v806 = vld [vmem:[#allocation5 + $0x100] sm:$0xff]
    %v807 = vld [vmem:[#allocation5 + $0x108] sm:$0xff]
    %v808 = vld [vmem:[#allocation5 + $0x110] sm:$0xff]
    %v809 = vld [vmem:[#allocation5 + $0x118] sm:$0xff]
    %v810 = vld [vmem:[#allocation5 + $0x120] sm:$0xff]
    %v811 = vld [vmem:[#allocation5 + $0x128] sm:$0xff]
    %v812 = vld [vmem:[#allocation5 + $0x130] sm:$0xff]
    %v813 = vld [vmem:[#allocation5 + $0x138] sm:$0xff]
    %v814 = vld [vmem:[#allocation5 + $0x140] sm:$0xff]
    %v815 = vld [vmem:[#allocation5 + $0x148] sm:$0xff]
    %v816 = vld [vmem:[#allocation5 + $0x150] sm:$0xff]
    %v817 = vld [vmem:[#allocation5 + $0x158] sm:$0xff]
    %v818 = vld [vmem:[#allocation5 + $0x160] sm:$0xff]
    %v819 = vld [vmem:[#allocation5 + $0x168] sm:$0xff]
    %v820 = vld [vmem:[#allocation5 + $0x170] sm:$0xff]
    %v821 = vld [vmem:[#allocation5 + $0x178] sm:$0xff]
    %v822 = vld [vmem:[#allocation5 + $0x180] sm:$0xff]
    %v823 = vld [vmem:[#allocation5 + $0x188] sm:$0xff]
    %v824 = vld [vmem:[#allocation5 + $0x190] sm:$0xff]
    %v825 = vld [vmem:[#allocation5 + $0x198] sm:$0xff]
    %v826 = vld [vmem:[#allocation5 + $0x1a0] sm:$0xff]
    %v827 = vld [vmem:[#allocation5 + $0x1a8] sm:$0xff]
    %v828 = vld [vmem:[#allocation5 + $0x1b0] sm:$0xff]
    %v829 = vld [vmem:[#allocation5 + $0x1b8] sm:$0xff]
    %v830 = vld [vmem:[#allocation5 + $0x1c0] sm:$0xff]
    %v831 = vld [vmem:[#allocation5 + $0x1c8] sm:$0xff]
    %v832 = vld [vmem:[#allocation5 + $0x1d0] sm:$0xff]
    %v833 = vld [vmem:[#allocation5 + $0x1d8] sm:$0xff]
    %v834 = vld [vmem:[#allocation5 + $0x1e0] sm:$0xff]
    %v835 = vld [vmem:[#allocation5 + $0x1e8] sm:$0xff]
    %v836 = vld [vmem:[#allocation5 + $0x1f0] sm:$0xff]
    %v837 = vld [vmem:[#allocation5 + $0x1f8] sm:$0xff]
    %v838 = vld [vmem:[#allocation5 + $0x200] sm:$0xff]
    %v839 = vld [vmem:[#allocation5 + $0x208] sm:$0xff]
    %v840 = vld [vmem:[#allocation5 + $0x210] sm:$0xff]
    %v841 = vld [vmem:[#allocation5 + $0x218] sm:$0xff]
    %v842 = vld [vmem:[#allocation5 + $0x220] sm:$0xff]
    %v843 = vld [vmem:[#allocation5 + $0x228] sm:$0xff]
    %v844 = vld [vmem:[#allocation5 + $0x230] sm:$0xff]
    %v845 = vld [vmem:[#allocation5 + $0x238] sm:$0xff]
    %v846 = vld [vmem:[#allocation5 + $0x240] sm:$0xff]
    %v847 = vld [vmem:[#allocation5 + $0x248] sm:$0xff]
    %v848 = vld [vmem:[#allocation5 + $0x250] sm:$0xff]
    %v849 = vld [vmem:[#allocation5 + $0x258] sm:$0xff]
    %v850 = vld [vmem:[#allocation5 + $0x260] sm:$0xff]
    %v851 = vld [vmem:[#allocation5 + $0x268] sm:$0xff]
    %v852 = vld [vmem:[#allocation5 + $0x270] sm:$0xff]
    %v853 = vld [vmem:[#allocation5 + $0x278] sm:$0xff]
    %v854 = vld [vmem:[#allocation5 + $0x280] sm:$0xff]
    %v855 = vld [vmem:[#allocation5 + $0x288] sm:$0xff]
    %v856 = vld [vmem:[#allocation5 + $0x290] sm:$0xff]
    %v857 = vld [vmem:[#allocation5 + $0x298] sm:$0xff]
    %v858 = vld [vmem:[#allocation5 + $0x2a0] sm:$0xff]
    %v859 = vld [vmem:[#allocation5 + $0x2a8] sm:$0xff]
    %v860 = vld [vmem:[#allocation5 + $0x2b0] sm:$0xff]
    %v861 = vld [vmem:[#allocation5 + $0x2b8] sm:$0xff]
    %v862 = vld [vmem:[#allocation5 + $0x2c0] sm:$0xff]
    %v863 = vld [vmem:[#allocation5 + $0x2c8] sm:$0xff]
    %v864 = vld [vmem:[#allocation5 + $0x2d0] sm:$0xff]
    %v865 = vld [vmem:[#allocation5 + $0x2d8] sm:$0xff]
    %v866 = vld [vmem:[#allocation5 + $0x2e0] sm:$0xff]
    %v867 = vld [vmem:[#allocation5 + $0x2e8] sm:$0xff]
    %v868 = vld [vmem:[#allocation5 + $0x2f0] sm:$0xff]
    %v869 = vld [vmem:[#allocation5 + $0x2f8] sm:$0xff]
    %v870 = vld [vmem:[#allocation5 + $0x300] sm:$0xff]
    %v871 = vld [vmem:[#allocation5 + $0x308] sm:$0xff]
    %v872 = vld [vmem:[#allocation5 + $0x310] sm:$0xff]
    %v873 = vld [vmem:[#allocation5 + $0x318] sm:$0xff]
    %v874 = vld [vmem:[#allocation5 + $0x320] sm:$0xff]
    %v875 = vld [vmem:[#allocation5 + $0x328] sm:$0xff]
    %v876 = vld [vmem:[#allocation5 + $0x330] sm:$0xff]
    %v877 = vld [vmem:[#allocation5 + $0x338] sm:$0xff]
    %v878 = vld [vmem:[#allocation5 + $0x340] sm:$0xff]
    %v879 = vld [vmem:[#allocation5 + $0x348] sm:$0xff]
    %v880 = vld [vmem:[#allocation5 + $0x350] sm:$0xff]
    %v881 = vld [vmem:[#allocation5 + $0x358] sm:$0xff]
    %v882 = vld [vmem:[#allocation5 + $0x360] sm:$0xff]
    %v883 = vld [vmem:[#allocation5 + $0x368] sm:$0xff]
    %v884 = vld [vmem:[#allocation5 + $0x370] sm:$0xff]
    %v885 = vld [vmem:[#allocation5 + $0x378] sm:$0xff]
    %v886 = vld [vmem:[#allocation5 + $0x380] sm:$0xff]
    %v887 = vld [vmem:[#allocation5 + $0x388] sm:$0xff]
    %v888 = vld [vmem:[#allocation5 + $0x390] sm:$0xff]
    %v889 = vld [vmem:[#allocation5 + $0x398] sm:$0xff]
    %v890 = vld [vmem:[#allocation5 + $0x3a0] sm:$0xff]
    %v891 = vld [vmem:[#allocation5 + $0x3a8] sm:$0xff]
    %v892 = vld [vmem:[#allocation5 + $0x3b0] sm:$0xff]
    %v893 = vld [vmem:[#allocation5 + $0x3b8] sm:$0xff]
    %v894 = vld [vmem:[#allocation5 + $0x3c0] sm:$0xff]
    %v895 = vld [vmem:[#allocation5 + $0x3c8] sm:$0xff]
    %v896 = vld [vmem:[#allocation5 + $0x3d0] sm:$0xff]
    %v897 = vld [vmem:[#allocation5 + $0x3d8] sm:$0xff]
    %v898 = vld [vmem:[#allocation5 + $0x3e0] sm:$0xff]
    %v899 = vld [vmem:[#allocation5 + $0x3e8] sm:$0xff]
    %v900 = vld [vmem:[#allocation5 + $0x3f0] sm:$0xff]
    %v901 = vld [vmem:[#allocation5 + $0x3f8] sm:$0xff]
    %v902 = vld [vmem:[#allocation5 + $0x400] sm:$0xff]
    %v903 = vld [vmem:[#allocation5 + $0x408] sm:$0xff]
    %v904 = vld [vmem:[#allocation5 + $0x410] sm:$0xff]
    %v905 = vld [vmem:[#allocation5 + $0x418] sm:$0xff]
    %v906 = vld [vmem:[#allocation5 + $0x420] sm:$0xff]
    %v907 = vld [vmem:[#allocation5 + $0x428] sm:$0xff]
    %v908 = vld [vmem:[#allocation5 + $0x430] sm:$0xff]
    %v909 = vld [vmem:[%s4] sm:$0x1]
    %v911 = vlaneseq
    %v912 = vshrl.u32 %v911, 7
    %v913 = vsub.s32 0, %v912
    %v914 = vrot.slane %v909, %v913
    %vm916 = vcmask 457728
    %v918 = vsel %vm916, %v773, 0
    %920 = vmatprep.subr.mxu0 0.0
    %921 = vmatpush1.msra.mxu0 %v774
    %922 = vmatprep.subr.mxu0 0.0
    %923 = vmatpush1.msra.mxu0 %v775
    %924 = vmatprep.subr.mxu0 0.0
    %925 = vmatpush1.msra.mxu0 %v776
    %926 = vmatprep.subr.mxu0 0.0
    %927 = vmatpush1.msra.mxu0 %v777
    %928 = vmatprep.subr.mxu0 0.0
    %929 = vmatpush1.msra.mxu0 %v778
    %930 = vmatprep.subr.mxu0 0.0
    %931 = vmatpush1.msra.mxu0 %v779
    %932 = vmatprep.subr.mxu0 0.0
    %933 = vmatpush1.msra.mxu0 %v780
    %934 = vmatprep.subr.mxu0 0.0
    %935 = vmatpush1.msra.mxu0 %v781
    %936 = vmatprep.subr.mxu0 0.0
    %937 = vmatpush1.msra.mxu0 %v782
    %938 = vmatprep.subr.mxu0 0.0
    %939 = vmatpush1.msra.mxu0 %v783
    %940 = vmatprep.subr.mxu0 0.0
    %941 = vmatpush1.msra.mxu0 %v784
    %942 = vmatprep.subr.mxu0 0.0
    %943 = vmatpush1.msra.mxu0 %v785
    %944 = vmatprep.subr.mxu0 0.0
    %945 = vmatpush1.msra.mxu0 %v786
    %946 = vmatprep.subr.mxu0 0.0
    %947 = vmatpush1.msra.mxu0 %v787
    %948 = vmatprep.subr.mxu0 0.0
    %949 = vmatpush1.msra.mxu0 %v788
    %950 = vmatprep.subr.mxu0 0.0
    %951 = vmatpush1.msra.mxu0 %v789
    %952 = vmatprep.subr.mxu0 0.0
    %953 = vmatpush1.msra.mxu0 %v790
    %954 = vmatprep.subr.mxu0 0.0
    %955 = vmatpush1.msra.mxu0 %v791
    %956 = vmatprep.subr.mxu0 0.0
    %957 = vmatpush1.msra.mxu0 %v792
    %958 = vmatprep.subr.mxu0 0.0
    %959 = vmatpush1.msra.mxu0 %v793
    %960 = vmatprep.subr.mxu0 0.0
    %961 = vmatpush1.msra.mxu0 %v794
    %962 = vmatprep.subr.mxu0 0.0
    %963 = vmatpush1.msra.mxu0 %v795
    %964 = vmatprep.subr.mxu0 0.0
    %965 = vmatpush1.msra.mxu0 %v796
    %966 = vmatprep.subr.mxu0 0.0
    %967 = vmatpush1.msra.mxu0 %v797
    %968 = vmatprep.subr.mxu0 0.0
    %969 = vmatpush1.msra.mxu0 %v798
    %970 = vmatprep.subr.mxu0 0.0
    %971 = vmatpush1.msra.mxu0 %v799
    %972 = vmatprep.subr.mxu0 0.0
    %973 = vmatpush1.msra.mxu0 %v800
    %974 = vmatprep.subr.mxu0 0.0
    %975 = vmatpush1.msra.mxu0 %v801
    %976 = vmatprep.subr.mxu0 0.0
    %977 = vmatpush1.msra.mxu0 %v802
    %978 = vmatprep.subr.mxu0 0.0
    %979 = vmatpush1.msra.mxu0 %v803
    %980 = vmatprep.subr.mxu0 0.0
    %981 = vmatpush1.msra.mxu0 %v804
    %982 = vmatprep.subr.mxu0 0.0
    %983 = vmatpush1.msra.mxu0 %v805
    %984 = vmatprep.mubr.f32.mxu0 %v766
    %985 = vmatmul.mubr.f32.gmra.mrb[0].mxu0 %v765
    %v986 = vpop.f32.mrb[0].mxu0
    %v987 = vadd.f32 %v914, %v986
    %v988 = vpop.f32.mrb[0].mxu0
    %989 = vdwg.mxu0
    %990 = vmatprep.subr.mxu0 0.0
    %991 = vmatpush1.msra.mxu0 %v806
    %992 = vmatprep.subr.mxu0 0.0
    %993 = vmatpush1.msra.mxu0 %v807
    %994 = vmatprep.subr.mxu0 0.0
    %995 = vmatpush1.msra.mxu0 %v808
    %996 = vmatprep.subr.mxu0 0.0
    %997 = vmatpush1.msra.mxu0 %v809
    %998 = vmatprep.subr.mxu0 0.0
    %999 = vmatpush1.msra.mxu0 %v810
    %1000 = vmatprep.subr.mxu0 0.0
    %1001 = vmatpush1.msra.mxu0 %v811
    %1002 = vmatprep.subr.mxu0 0.0
    %1003 = vmatpush1.msra.mxu0 %v812
    %1004 = vmatprep.subr.mxu0 0.0
    %1005 = vmatpush1.msra.mxu0 %v813
    %1006 = vmatprep.subr.mxu0 0.0
    %1007 = vmatpush1.msra.mxu0 %v814
    %1008 = vmatprep.subr.mxu0 0.0
    %1009 = vmatpush1.msra.mxu0 %v815
    %1010 = vmatprep.subr.mxu0 0.0
    %1011 = vmatpush1.msra.mxu0 %v816
    %1012 = vmatprep.subr.mxu0 0.0
    %1013 = vmatpush1.msra.mxu0 %v817
    %1014 = vmatprep.subr.mxu0 0.0
    %1015 = vmatpush1.msra.mxu0 %v818
    %1016 = vmatprep.subr.mxu0 0.0
    %1017 = vmatpush1.msra.mxu0 %v819
    %1018 = vmatprep.subr.mxu0 0.0
    %1019 = vmatpush1.msra.mxu0 %v820
    %1020 = vmatprep.subr.mxu0 0.0
    %1021 = vmatpush1.msra.mxu0 %v821
    %1022 = vmatprep.subr.mxu0 0.0
    %1023 = vmatpush1.msra.mxu0 %v822
    %1024 = vmatprep.subr.mxu0 0.0
    %1025 = vmatpush1.msra.mxu0 %v823
    %1026 = vmatprep.subr.mxu0 0.0
    %1027 = vmatpush1.msra.mxu0 %v824
    %1028 = vmatprep.subr.mxu0 0.0
    %1029 = vmatpush1.msra.mxu0 %v825
    %1030 = vmatprep.subr.mxu0 0.0
    %1031 = vmatpush1.msra.mxu0 %v826
    %1032 = vmatprep.subr.mxu0 0.0
    %1033 = vmatpush1.msra.mxu0 %v827
    %1034 = vmatprep.subr.mxu0 0.0
    %1035 = vmatpush1.msra.mxu0 %v828
    %1036 = vmatprep.subr.mxu0 0.0
    %1037 = vmatpush1.msra.mxu0 %v829
    %1038 = vmatprep.subr.mxu0 0.0
    %1039 = vmatpush1.msra.mxu0 %v830
    %1040 = vmatprep.subr.mxu0 0.0
    %1041 = vmatpush1.msra.mxu0 %v831
    %1042 = vmatprep.subr.mxu0 0.0
    %1043 = vmatpush1.msra.mxu0 %v832
    %1044 = vmatprep.subr.mxu0 0.0
    %1045 = vmatpush1.msra.mxu0 %v833
    %1046 = vmatprep.subr.mxu0 0.0
    %1047 = vmatpush1.msra.mxu0 %v834
    %1048 = vmatprep.subr.mxu0 0.0
    %1049 = vmatpush1.msra.mxu0 %v835
    %1050 = vmatprep.subr.mxu0 0.0
    %1051 = vmatpush1.msra.mxu0 %v836
    %1052 = vmatprep.subr.mxu0 0.0
    %1053 = vmatpush1.msra.mxu0 %v837
    %1054 = vmatprep.mubr.f32.mxu0 %v768
    %1055 = vmatmul.mubr.f32.gmra.mrb[0].mxu0 %v767
    %v1056 = vpop.f32.mrb[0].mxu0
    %v1057 = vadd.f32 %v987, %v1056
    %v1058 = vpop.f32.mrb[0].mxu0
    %1059 = vdwg.mxu0
    %1060 = vmatprep.subr.mxu0 0.0
    %1061 = vmatpush1.msra.mxu0 %v838
    %1062 = vmatprep.subr.mxu0 0.0
    %1063 = vmatpush1.msra.mxu0 %v839
    %1064 = vmatprep.subr.mxu0 0.0
    %1065 = vmatpush1.msra.mxu0 %v840
    %1066 = vmatprep.subr.mxu0 0.0
    %1067 = vmatpush1.msra.mxu0 %v841
    %1068 = vmatprep.subr.mxu0 0.0
    %1069 = vmatpush1.msra.mxu0 %v842
    %1070 = vmatprep.subr.mxu0 0.0
    %1071 = vmatpush1.msra.mxu0 %v843
    %1072 = vmatprep.subr.mxu0 0.0
    %1073 = vmatpush1.msra.mxu0 %v844
    %1074 = vmatprep.subr.mxu0 0.0
    %1075 = vmatpush1.msra.mxu0 %v845
    %1076 = vmatprep.subr.mxu0 0.0
    %1077 = vmatpush1.msra.mxu0 %v846
    %1078 = vmatprep.subr.mxu0 0.0
    %1079 = vmatpush1.msra.mxu0 %v847
    %1080 = vmatprep.subr.mxu0 0.0
    %1081 = vmatpush1.msra.mxu0 %v848
    %1082 = vmatprep.subr.mxu0 0.0
    %1083 = vmatpush1.msra.mxu0 %v849
    %1084 = vmatprep.subr.mxu0 0.0
    %1085 = vmatpush1.msra.mxu0 %v850
    %1086 = vmatprep.subr.mxu0 0.0
    %1087 = vmatpush1.msra.mxu0 %v851
    %1088 = vmatprep.subr.mxu0 0.0
    %1089 = vmatpush1.msra.mxu0 %v852
    %1090 = vmatprep.subr.mxu0 0.0
    %1091 = vmatpush1.msra.mxu0 %v853
    %1092 = vmatprep.subr.mxu0 0.0
    %1093 = vmatpush1.msra.mxu0 %v854
    %1094 = vmatprep.subr.mxu0 0.0
    %1095 = vmatpush1.msra.mxu0 %v855
    %1096 = vmatprep.subr.mxu0 0.0
    %1097 = vmatpush1.msra.mxu0 %v856
    %1098 = vmatprep.subr.mxu0 0.0
    %1099 = vmatpush1.msra.mxu0 %v857
    %1100 = vmatprep.subr.mxu0 0.0
    %1101 = vmatpush1.msra.mxu0 %v858
    %1102 = vmatprep.subr.mxu0 0.0
    %1103 = vmatpush1.msra.mxu0 %v859
    %1104 = vmatprep.subr.mxu0 0.0
    %1105 = vmatpush1.msra.mxu0 %v860
    %1106 = vmatprep.subr.mxu0 0.0
    %1107 = vmatpush1.msra.mxu0 %v861
    %1108 = vmatprep.subr.mxu0 0.0
    %1109 = vmatpush1.msra.mxu0 %v862
    %1110 = vmatprep.subr.mxu0 0.0
    %1111 = vmatpush1.msra.mxu0 %v863
    %1112 = vmatprep.subr.mxu0 0.0
    %1113 = vmatpush1.msra.mxu0 %v864
    %1114 = vmatprep.subr.mxu0 0.0
    %1115 = vmatpush1.msra.mxu0 %v865
    %1116 = vmatprep.subr.mxu0 0.0
    %1117 = vmatpush1.msra.mxu0 %v866
    %1118 = vmatprep.subr.mxu0 0.0
    %1119 = vmatpush1.msra.mxu0 %v867
    %1120 = vmatprep.subr.mxu0 0.0
    %1121 = vmatpush1.msra.mxu0 %v868
    %1122 = vmatprep.subr.mxu0 0.0
    %1123 = vmatpush1.msra.mxu0 %v869
    %1124 = vmatprep.mubr.f32.mxu0 %v770
    %1125 = vmatmul.mubr.f32.gmra.mrb[0].mxu0 %v769
    %v1126 = vpop.f32.mrb[0].mxu0
    %v1127 = vadd.f32 %v1057, %v1126
    %v1128 = vpop.f32.mrb[0].mxu0
    %1129 = vdwg.mxu0
    %1130 = vmatprep.subr.mxu0 0.0
    %1131 = vmatpush1.msra.mxu0 %v870
    %1132 = vmatprep.subr.mxu0 0.0
    %1133 = vmatpush1.msra.mxu0 %v871
    %1134 = vmatprep.subr.mxu0 0.0
    %1135 = vmatpush1.msra.mxu0 %v872
    %1136 = vmatprep.subr.mxu0 0.0
    %1137 = vmatpush1.msra.mxu0 %v873
    %1138 = vmatprep.subr.mxu0 0.0
    %1139 = vmatpush1.msra.mxu0 %v874
    %1140 = vmatprep.subr.mxu0 0.0
    %1141 = vmatpush1.msra.mxu0 %v875
    %1142 = vmatprep.subr.mxu0 0.0
    %1143 = vmatpush1.msra.mxu0 %v876
    %1144 = vmatprep.subr.mxu0 0.0
    %1145 = vmatpush1.msra.mxu0 %v877
    %1146 = vmatprep.subr.mxu0 0.0
    %1147 = vmatpush1.msra.mxu0 %v878
    %1148 = vmatprep.subr.mxu0 0.0
    %1149 = vmatpush1.msra.mxu0 %v879
    %1150 = vmatprep.subr.mxu0 0.0
    %1151 = vmatpush1.msra.mxu0 %v880
    %1152 = vmatprep.subr.mxu0 0.0
    %1153 = vmatpush1.msra.mxu0 %v881
    %1154 = vmatprep.subr.mxu0 0.0
    %1155 = vmatpush1.msra.mxu0 %v882
    %1156 = vmatprep.subr.mxu0 0.0
    %1157 = vmatpush1.msra.mxu0 %v883
    %1158 = vmatprep.subr.mxu0 0.0
    %1159 = vmatpush1.msra.mxu0 %v884
    %1160 = vmatprep.subr.mxu0 0.0
    %1161 = vmatpush1.msra.mxu0 %v885
    %1162 = vmatprep.subr.mxu0 0.0
    %1163 = vmatpush1.msra.mxu0 %v886
    %1164 = vmatprep.subr.mxu0 0.0
    %1165 = vmatpush1.msra.mxu0 %v887
    %1166 = vmatprep.subr.mxu0 0.0
    %1167 = vmatpush1.msra.mxu0 %v888
    %1168 = vmatprep.subr.mxu0 0.0
    %1169 = vmatpush1.msra.mxu0 %v889
    %1170 = vmatprep.subr.mxu0 0.0
    %1171 = vmatpush1.msra.mxu0 %v890
    %1172 = vmatprep.subr.mxu0 0.0
    %1173 = vmatpush1.msra.mxu0 %v891
    %1174 = vmatprep.subr.mxu0 0.0
    %1175 = vmatpush1.msra.mxu0 %v892
    %1176 = vmatprep.subr.mxu0 0.0
    %1177 = vmatpush1.msra.mxu0 %v893
    %1178 = vmatprep.subr.mxu0 0.0
    %1179 = vmatpush1.msra.mxu0 %v894
    %1180 = vmatprep.subr.mxu0 0.0
    %1181 = vmatpush1.msra.mxu0 %v895
    %1182 = vmatprep.subr.mxu0 0.0
    %1183 = vmatpush1.msra.mxu0 %v896
    %1184 = vmatprep.subr.mxu0 0.0
    %1185 = vmatpush1.msra.mxu0 %v897
    %1186 = vmatprep.subr.mxu0 0.0
    %1187 = vmatpush1.msra.mxu0 %v898
    %1188 = vmatprep.subr.mxu0 0.0
    %1189 = vmatpush1.msra.mxu0 %v899
    %1190 = vmatprep.subr.mxu0 0.0
    %1191 = vmatpush1.msra.mxu0 %v900
    %1192 = vmatprep.subr.mxu0 0.0
    %1193 = vmatpush1.msra.mxu0 %v901
    %1194 = vmatprep.mubr.f32.mxu0 %v772
    %1195 = vmatmul.mubr.f32.gmra.mrb[0].mxu0 %v771
    %v1196 = vpop.f32.mrb[0].mxu0
    %v1197 = vadd.f32 %v1127, %v1196
    %v1198 = vpop.f32.mrb[0].mxu0
    %1199 = vdwg.mxu0
    %1200 = vmatprep.subr.mxu0 0.0
    %1201 = vmatpush1.msra.mxu0 %v902
    %1202 = vmatprep.subr.mxu0 0.0
    %1203 = vmatpush1.msra.mxu0 %v903
    %1204 = vmatprep.subr.mxu0 0.0
    %1205 = vmatpush1.msra.mxu0 %v904
    %1206 = vmatprep.subr.mxu0 0.0
    %1207 = vmatpush1.msra.mxu0 %v905
    %1208 = vmatprep.subr.mxu0 0.0
    %1209 = vmatpush1.msra.mxu0 %v906
    %1210 = vmatprep.subr.mxu0 0.0
    %1211 = vmatpush1.msra.mxu0 %v907
    %1212 = vmatprep.subr.mxu0 0.0
    %1213 = vmatpush1.msra.mxu0 %v908
    %1214 = vmatprep.subr.mxu0 0.0
    %1215 = vmatpush1.msra.mxu0 0.0
    %1216 = vmatprep.subr.mxu0 0.0
    %1217 = vmatpush1.msra.mxu0 0.0
    %1218 = vmatprep.subr.mxu0 0.0
    %1219 = vmatpush1.msra.mxu0 0.0
    %1220 = vmatprep.subr.mxu0 0.0
    %1221 = vmatpush1.msra.mxu0 0.0
    %1222 = vmatprep.subr.mxu0 0.0
    %1223 = vmatpush1.msra.mxu0 0.0
    %1224 = vmatprep.subr.mxu0 0.0
    %1225 = vmatpush1.msra.mxu0 0.0
    %1226 = vmatprep.subr.mxu0 0.0
    %1227 = vmatpush1.msra.mxu0 0.0
    %1228 = vmatprep.subr.mxu0 0.0
    %1229 = vmatpush1.msra.mxu0 0.0
    %1230 = vmatprep.subr.mxu0 0.0
    %1231 = vmatpush1.msra.mxu0 0.0
    %1232 = vmatprep.subr.mxu0 0.0
    %1233 = vmatpush1.msra.mxu0 0.0
    %1234 = vmatprep.subr.mxu0 0.0
    %1235 = vmatpush1.msra.mxu0 0.0
    %1236 = vmatprep.subr.mxu0 0.0
    %1237 = vmatpush1.msra.mxu0 0.0
    %1238 = vmatprep.subr.mxu0 0.0
    %1239 = vmatpush1.msra.mxu0 0.0
    %1240 = vmatprep.subr.mxu0 0.0
    %1241 = vmatpush1.msra.mxu0 0.0
    %1242 = vmatprep.subr.mxu0 0.0
    %1243 = vmatpush1.msra.mxu0 0.0
    %1244 = vmatprep.subr.mxu0 0.0
    %1245 = vmatpush1.msra.mxu0 0.0
    %1246 = vmatprep.subr.mxu0 0.0
    %1247 = vmatpush1.msra.mxu0 0.0
    %1248 = vmatprep.subr.mxu0 0.0
    %1249 = vmatpush1.msra.mxu0 0.0
    %1250 = vmatprep.subr.mxu0 0.0
    %1251 = vmatpush1.msra.mxu0 0.0
    %1252 = vmatprep.subr.mxu0 0.0
    %1253 = vmatpush1.msra.mxu0 0.0
    %1254 = vmatprep.subr.mxu0 0.0
    %1255 = vmatpush1.msra.mxu0 0.0
    %1256 = vmatprep.subr.mxu0 0.0
    %1257 = vmatpush1.msra.mxu0 0.0
    %1258 = vmatprep.subr.mxu0 0.0
    %1259 = vmatpush1.msra.mxu0 0.0
    %1260 = vmatprep.subr.mxu0 0.0
    %1261 = vmatpush1.msra.mxu0 0.0
    %1262 = vmatprep.subr.mxu0 0.0
    %1263 = vmatpush1.msra.mxu0 0.0
    %1264 = vmatprep.mubr.f32.mxu0 0.0
    %1265 = vmatmul.mubr.f32.gmra.mrb[0].mxu0 %v918
    %v1266 = vpop.f32.mrb[0].mxu0
    %v1267 = vadd.f32 %v1197, %v1266
    %v1268 = vpop.f32.mrb[0].mxu0
    %1269 = vdwg.mxu0
    %v1270 = vmax.f32 %v1267, 0.0
    %v1271 = vld [vmem:[%s5] sm:$0xff]
    %v1272 = vld [vmem:[%s5 + $0x8] sm:$0xff]
    %v1273 = vld [vmem:[%s5 + $0x10] sm:$0xff]
    %v1274 = vld [vmem:[%s5 + $0x18] sm:$0xff]
    %v1275 = vld [vmem:[%s5 + $0x20] sm:$0xff]
    %v1276 = vld [vmem:[%s5 + $0x28] sm:$0xff]
    %v1277 = vld [vmem:[%s5 + $0x30] sm:$0xff]
    %v1278 = vld [vmem:[%s5 + $0x38] sm:$0xff]
    %v1279 = vld [vmem:[%s5 + $0x40] sm:$0xff]
    %v1280 = vld [vmem:[%s5 + $0x48] sm:$0xff]
    %v1281 = vld [vmem:[%s5 + $0x50] sm:$0xff]
    %v1282 = vld [vmem:[%s5 + $0x58] sm:$0xff]
    %v1283 = vld [vmem:[%s5 + $0x60] sm:$0xff]
    %v1284 = vld [vmem:[%s5 + $0x68] sm:$0x1]
    %v1285 = vld [vmem:[%s6] sm:$0x1]
    %v1287 = vlaneseq
    %v1288 = vshrl.u32 %v1287, 7
    %v1289 = vsub.s32 0, %v1288
    %v1290 = vrot.slane %v1285, %v1289
    %vm1292 = vcmask 859136
    %v1294 = vsel %vm1292, %v1270, 0
    %vm1296 = vcmask 1040384
    %v1298 = vsel %vm1296, %v1284, 0
    %1300 = vmatprep.subr.mxu0 0.0
    %1301 = vmatpush1.msra.mxu0 %v1271
    %1302 = vmatprep.subr.mxu0 0.0
    %1303 = vmatpush1.msra.mxu0 %v1272
    %1304 = vmatprep.subr.mxu0 0.0
    %1305 = vmatpush1.msra.mxu0 %v1273
    %1306 = vmatprep.subr.mxu0 0.0
    %1307 = vmatpush1.msra.mxu0 %v1274
    %1308 = vmatprep.subr.mxu0 0.0
    %1309 = vmatpush1.msra.mxu0 %v1275
    %1310 = vmatprep.subr.mxu0 0.0
    %1311 = vmatpush1.msra.mxu0 %v1276
    %1312 = vmatprep.subr.mxu0 0.0
    %1313 = vmatpush1.msra.mxu0 %v1277
    %1314 = vmatprep.subr.mxu0 0.0
    %1315 = vmatpush1.msra.mxu0 %v1278
    %1316 = vmatprep.subr.mxu0 0.0
    %1317 = vmatpush1.msra.mxu0 %v1279
    %1318 = vmatprep.subr.mxu0 0.0
    %1319 = vmatpush1.msra.mxu0 %v1280
    %1320 = vmatprep.subr.mxu0 0.0
    %1321 = vmatpush1.msra.mxu0 %v1281
    %1322 = vmatprep.subr.mxu0 0.0
    %1323 = vmatpush1.msra.mxu0 %v1282
    %1324 = vmatprep.subr.mxu0 0.0
    %1325 = vmatpush1.msra.mxu0 %v1283
    %1326 = vmatprep.subr.mxu0 0.0
    %1327 = vmatpush1.msra.mxu0 %v1298
    %1328 = vmatprep.subr.mxu0 0.0
    %1329 = vmatpush1.msra.mxu0 0.0
    %1330 = vmatprep.subr.mxu0 0.0
    %1331 = vmatpush1.msra.mxu0 0.0
    %1332 = vmatprep.subr.mxu0 0.0
    %1333 = vmatpush1.msra.mxu0 0.0
    %1334 = vmatprep.subr.mxu0 0.0
    %1335 = vmatpush1.msra.mxu0 0.0
    %1336 = vmatprep.subr.mxu0 0.0
    %1337 = vmatpush1.msra.mxu0 0.0
    %1338 = vmatprep.subr.mxu0 0.0
    %1339 = vmatpush1.msra.mxu0 0.0
    %1340 = vmatprep.subr.mxu0 0.0
    %1341 = vmatpush1.msra.mxu0 0.0
    %1342 = vmatprep.subr.mxu0 0.0
    %1343 = vmatpush1.msra.mxu0 0.0
    %1344 = vmatprep.subr.mxu0 0.0
    %1345 = vmatpush1.msra.mxu0 0.0
    %1346 = vmatprep.subr.mxu0 0.0
    %1347 = vmatpush1.msra.mxu0 0.0
    %1348 = vmatprep.subr.mxu0 0.0
    %1349 = vmatpush1.msra.mxu0 0.0
    %1350 = vmatprep.subr.mxu0 0.0
    %1351 = vmatpush1.msra.mxu0 0.0
    %1352 = vmatprep.subr.mxu0 0.0
    %1353 = vmatpush1.msra.mxu0 0.0
    %1354 = vmatprep.subr.mxu0 0.0
    %1355 = vmatpush1.msra.mxu0 0.0
    %1356 = vmatprep.subr.mxu0 0.0
    %1357 = vmatpush1.msra.mxu0 0.0
    %1358 = vmatprep.subr.mxu0 0.0
    %1359 = vmatpush1.msra.mxu0 0.0
    %1360 = vmatprep.subr.mxu0 0.0
    %1361 = vmatpush1.msra.mxu0 0.0
    %1362 = vmatprep.subr.mxu0 0.0
    %1363 = vmatpush1.msra.mxu0 0.0
    %1364 = vmatprep.mubr.f32.mxu0 0.0
    %1365 = vmatmul.mubr.f32.gmra.mrb[0].mxu0 %v1294
    %v1366 = vpop.f32.mrb[0].mxu0
    %v1367 = vadd.f32 %v1290, %v1366
    %v1368 = vpop.f32.mrb[0].mxu0
    %1369 = vdwg.mxu0
    %v1370 = vmax.f32 %v1367, 0.0
    %v1371 = vld [vmem:[#allocation7] sm:$0xff]
    %v1372 = vld [vmem:[#allocation7 + $0x8] sm:$0xff]
    %v1373 = vld [vmem:[#allocation7 + $0x10] sm:$0xff]
    %v1374 = vld [vmem:[#allocation7 + $0x18] sm:$0xff]
    %v1375 = vld [vmem:[#allocation7 + $0x20] sm:$0xff]
    %v1376 = vld [vmem:[#allocation7 + $0x28] sm:$0xff]
    %v1377 = vld [vmem:[#allocation7 + $0x30] sm:$0xff]
    %v1378 = vld [vmem:[#allocation7 + $0x38] sm:$0xff]
    %v1379 = vld [vmem:[#allocation7 + $0x40] sm:$0x3f]
    %v1380 = vld [vmem:[%s8] sm:$0x1]
    %v1382 = vlaneseq
    %v1383 = vshrl.u32 %v1382, 7
    %v1384 = vsub.s32 0, %v1383
    %v1385 = vrot.slane %v1380, %v1384
    %vm1387 = vcmask 572416
    %v1389 = vsel %vm1387, %v1370, 0
    %vm1391 = vcmask 1045504
    %v1393 = vsel %vm1391, %v1379, 0
    %1395 = vmatprep.subr.mxu0 0.0
    %1396 = vmatpush1.msra.mxu0 %v1371
    %1397 = vmatprep.subr.mxu0 0.0
    %1398 = vmatpush1.msra.mxu0 %v1372
    %1399 = vmatprep.subr.mxu0 0.0
    %1400 = vmatpush1.msra.mxu0 %v1373
    %1401 = vmatprep.subr.mxu0 0.0
    %1402 = vmatpush1.msra.mxu0 %v1374
    %1403 = vmatprep.subr.mxu0 0.0
    %1404 = vmatpush1.msra.mxu0 %v1375
    %1405 = vmatprep.subr.mxu0 0.0
    %1406 = vmatpush1.msra.mxu0 %v1376
    %1407 = vmatprep.subr.mxu0 0.0
    %1408 = vmatpush1.msra.mxu0 %v1377
    %1409 = vmatprep.subr.mxu0 0.0
    %1410 = vmatpush1.msra.mxu0 %v1378
    %1411 = vmatprep.subr.mxu0 0.0
    %1412 = vmatpush1.msra.mxu0 %v1393
    %1413 = vmatprep.subr.mxu0 0.0
    %1414 = vmatpush1.msra.mxu0 0.0
    %1415 = vmatprep.subr.mxu0 0.0
    %1416 = vmatpush1.msra.mxu0 0.0
    %1417 = vmatprep.subr.mxu0 0.0
    %1418 = vmatpush1.msra.mxu0 0.0
    %1419 = vmatprep.subr.mxu0 0.0
    %1420 = vmatpush1.msra.mxu0 0.0
    %1421 = vmatprep.subr.mxu0 0.0
    %1422 = vmatpush1.msra.mxu0 0.0
    %1423 = vmatprep.subr.mxu0 0.0
    %1424 = vmatpush1.msra.mxu0 0.0
    %1425 = vmatprep.subr.mxu0 0.0
    %1426 = vmatpush1.msra.mxu0 0.0
    %1427 = vmatprep.subr.mxu0 0.0
    %1428 = vmatpush1.msra.mxu0 0.0
    %1429 = vmatprep.subr.mxu0 0.0
    %1430 = vmatpush1.msra.mxu0 0.0
    %1431 = vmatprep.subr.mxu0 0.0
    %1432 = vmatpush1.msra.mxu0 0.0
    %1433 = vmatprep.subr.mxu0 0.0
    %1434 = vmatpush1.msra.mxu0 0.0
    %1435 = vmatprep.subr.mxu0 0.0
    %1436 = vmatpush1.msra.mxu0 0.0
    %1437 = vmatprep.subr.mxu0 0.0
    %1438 = vmatpush1.msra.mxu0 0.0
    %1439 = vmatprep.subr.mxu0 0.0
    %1440 = vmatpush1.msra.mxu0 0.0
    %1441 = vmatprep.subr.mxu0 0.0
    %1442 = vmatpush1.msra.mxu0 0.0
    %1443 = vmatprep.subr.mxu0 0.0
    %1444 = vmatpush1.msra.mxu0 0.0
    %1445 = vmatprep.subr.mxu0 0.0
    %1446 = vmatpush1.msra.mxu0 0.0
    %1447 = vmatprep.subr.mxu0 0.0
    %1448 = vmatpush1.msra.mxu0 0.0
    %1449 = vmatprep.subr.mxu0 0.0
    %1450 = vmatpush1.msra.mxu0 0.0
    %1451 = vmatprep.subr.mxu0 0.0
    %1452 = vmatpush1.msra.mxu0 0.0
    %1453 = vmatprep.subr.mxu0 0.0
    %1454 = vmatpush1.msra.mxu0 0.0
    %1455 = vmatprep.subr.mxu0 0.0
    %1456 = vmatpush1.msra.mxu0 0.0
    %1457 = vmatprep.subr.mxu0 0.0
    %1458 = vmatpush1.msra.mxu0 0.0
    %1459 = vmatprep.mubr.f32.mxu0 0.0
    %1460 = vmatmul.mubr.f32.gmra.mrb[0].mxu0 %v1389
    %v1461 = vpop.f32.mrb[0].mxu0
    %v1462 = vadd.f32 %v1385, %v1461
    %v1463 = vpop.f32.mrb[0].mxu0
    %1464 = vdwg.mxu0
    %v1465 = vmax.f32 %v1462, 0.0
    %v1466 = vld [vmem:[#allocation8] sm:$0xff]
    %v1467 = vld [vmem:[#allocation8 + $0x8] sm:$0xff]
    %v1468 = vld [vmem:[#allocation8 + $0x10] sm:$0xff]
    %v1469 = vld [vmem:[#allocation8 + $0x18] sm:$0xff]
    %v1470 = vld [vmem:[#allocation8 + $0x20] sm:$0xff]
    %v1471 = vld [vmem:[#allocation8 + $0x28] sm:$0xff]
    %v1472 = vld [vmem:[#allocation8 + $0x30] sm:$0xff]
    %v1473 = vld [vmem:[#allocation8 + $0x38] sm:$0xff]
    %v1474 = vld [vmem:[#allocation8 + $0x40] sm:$0x3f]
    %v1475 = vld [vmem:[%s10] sm:$0x1]
    %v1477 = vlaneseq
    %v1478 = vshrl.u32 %v1477, 7
    %v1479 = vsub.s32 0, %v1478
    %v1480 = vrot.slane %v1475, %v1479
    %v1483 = vsel %vm1387, %v1465, 0
    %v1486 = vsel %vm1391, %v1474, 0
    %1488 = vmatprep.subr.mxu0 0.0
    %1489 = vmatpush1.msra.mxu0 %v1466
    %1490 = vmatprep.subr.mxu0 0.0
    %1491 = vmatpush1.msra.mxu0 %v1467
    %1492 = vmatprep.subr.mxu0 0.0
    %1493 = vmatpush1.msra.mxu0 %v1468
    %1494 = vmatprep.subr.mxu0 0.0
    %1495 = vmatpush1.msra.mxu0 %v1469
    %1496 = vmatprep.subr.mxu0 0.0
    %1497 = vmatpush1.msra.mxu0 %v1470
    %1498 = vmatprep.subr.mxu0 0.0
    %1499 = vmatpush1.msra.mxu0 %v1471
    %1500 = vmatprep.subr.mxu0 0.0
    %1501 = vmatpush1.msra.mxu0 %v1472
    %1502 = vmatprep.subr.mxu0 0.0
    %1503 = vmatpush1.msra.mxu0 %v1473
    %1504 = vmatprep.subr.mxu0 0.0
    %1505 = vmatpush1.msra.mxu0 %v1486
    %1506 = vmatprep.subr.mxu0 0.0
    %1507 = vmatpush1.msra.mxu0 0.0
    %1508 = vmatprep.subr.mxu0 0.0
    %1509 = vmatpush1.msra.mxu0 0.0
    %1510 = vmatprep.subr.mxu0 0.0
    %1511 = vmatpush1.msra.mxu0 0.0
    %1512 = vmatprep.subr.mxu0 0.0
    %1513 = vmatpush1.msra.mxu0 0.0
    %1514 = vmatprep.subr.mxu0 0.0
    %1515 = vmatpush1.msra.mxu0 0.0
    %1516 = vmatprep.subr.mxu0 0.0
    %1517 = vmatpush1.msra.mxu0 0.0
    %1518 = vmatprep.subr.mxu0 0.0
    %1519 = vmatpush1.msra.mxu0 0.0
    %1520 = vmatprep.subr.mxu0 0.0
    %1521 = vmatpush1.msra.mxu0 0.0
    %1522 = vmatprep.subr.mxu0 0.0
    %1523 = vmatpush1.msra.mxu0 0.0
    %1524 = vmatprep.subr.mxu0 0.0
    %1525 = vmatpush1.msra.mxu0 0.0
    %1526 = vmatprep.subr.mxu0 0.0
    %1527 = vmatpush1.msra.mxu0 0.0
    %1528 = vmatprep.subr.mxu0 0.0
    %1529 = vmatpush1.msra.mxu0 0.0
    %1530 = vmatprep.subr.mxu0 0.0
    %1531 = vmatpush1.msra.mxu0 0.0
    %1532 = vmatprep.subr.mxu0 0.0
    %1533 = vmatpush1.msra.mxu0 0.0
    %1534 = vmatprep.subr.mxu0 0.0
    %1535 = vmatpush1.msra.mxu0 0.0
    %1536 = vmatprep.subr.mxu0 0.0
    %1537 = vmatpush1.msra.mxu0 0.0
    %1538 = vmatprep.subr.mxu0 0.0
    %1539 = vmatpush1.msra.mxu0 0.0
    %1540 = vmatprep.subr.mxu0 0.0
    %1541 = vmatpush1.msra.mxu0 0.0
    %1542 = vmatprep.subr.mxu0 0.0
    %1543 = vmatpush1.msra.mxu0 0.0
    %1544 = vmatprep.subr.mxu0 0.0
    %1545 = vmatpush1.msra.mxu0 0.0
    %1546 = vmatprep.subr.mxu0 0.0
    %1547 = vmatpush1.msra.mxu0 0.0
    %1548 = vmatprep.subr.mxu0 0.0
    %1549 = vmatpush1.msra.mxu0 0.0
    %1550 = vmatprep.subr.mxu0 0.0
    %1551 = vmatpush1.msra.mxu0 0.0
    %1552 = vmatprep.mubr.f32.mxu0 0.0
    %1553 = vmatmul.mubr.f32.gmra.mrb[0].mxu0 %v1483
    %v1554 = vpop.f32.mrb[0].mxu0
    %v1555 = vadd.f32 %v1480, %v1554
    %v1556 = vpop.f32.mrb[0].mxu0
    %1557 = vdwg.mxu0
    %v1558 = vld [vmem:[#allocation10] sm:$0xff]
    %v1559 = vld [vmem:[#allocation10 + $0x8] sm:$0xff]
    %v1560 = vld [vmem:[#allocation10 + $0x10] sm:$0xff]
    %v1561 = vld [vmem:[#allocation10 + $0x18] sm:$0xff]
    %v1562 = vld [vmem:[#allocation10 + $0x20] sm:$0xff]
    %v1563 = vld [vmem:[#allocation10 + $0x28] sm:$0xff]
    %v1564 = vld [vmem:[#allocation10 + $0x30] sm:$0xff]
    %v1565 = vld [vmem:[#allocation10 + $0x38] sm:$0xff]
    %v1566 = vld [vmem:[#allocation10 + $0x40] sm:$0x3f]
    %v1567 = vld [vmem:[%s12] sm:$0x1]
    %v1569 = vlaneseq
    %v1570 = vshrl.u32 %v1569, 7
    %v1571 = vsub.s32 0, %v1570
    %v1572 = vrot.slane %v1567, %v1571
    %v1575 = vsel %vm1391, %v1566, 0
    %1577 = vmatprep.subr.mxu0 0.0
    %1578 = vmatpush1.msra.mxu0 %v1558
    %1579 = vmatprep.subr.mxu0 0.0
    %1580 = vmatpush1.msra.mxu0 %v1559
    %1581 = vmatprep.subr.mxu0 0.0
    %1582 = vmatpush1.msra.mxu0 %v1560
    %1583 = vmatprep.subr.mxu0 0.0
    %1584 = vmatpush1.msra.mxu0 %v1561
    %1585 = vmatprep.subr.mxu0 0.0
    %1586 = vmatpush1.msra.mxu0 %v1562
    %1587 = vmatprep.subr.mxu0 0.0
    %1588 = vmatpush1.msra.mxu0 %v1563
    %1589 = vmatprep.subr.mxu0 0.0
    %1590 = vmatpush1.msra.mxu0 %v1564
    %1591 = vmatprep.subr.mxu0 0.0
    %1592 = vmatpush1.msra.mxu0 %v1565
    %1593 = vmatprep.subr.mxu0 0.0
    %1594 = vmatpush1.msra.mxu0 %v1575
    %1595 = vmatprep.subr.mxu0 0.0
    %1596 = vmatpush1.msra.mxu0 0.0
    %1597 = vmatprep.subr.mxu0 0.0
    %1598 = vmatpush1.msra.mxu0 0.0
    %1599 = vmatprep.subr.mxu0 0.0
    %1600 = vmatpush1.msra.mxu0 0.0
    %1601 = vmatprep.subr.mxu0 0.0
    %1602 = vmatpush1.msra.mxu0 0.0
    %1603 = vmatprep.subr.mxu0 0.0
    %1604 = vmatpush1.msra.mxu0 0.0
    %1605 = vmatprep.subr.mxu0 0.0
    %1606 = vmatpush1.msra.mxu0 0.0
    %1607 = vmatprep.subr.mxu0 0.0
    %1608 = vmatpush1.msra.mxu0 0.0
    %1609 = vmatprep.subr.mxu0 0.0
    %1610 = vmatpush1.msra.mxu0 0.0
    %1611 = vmatprep.subr.mxu0 0.0
    %1612 = vmatpush1.msra.mxu0 0.0
    %1613 = vmatprep.subr.mxu0 0.0
    %1614 = vmatpush1.msra.mxu0 0.0
    %1615 = vmatprep.subr.mxu0 0.0
    %1616 = vmatpush1.msra.mxu0 0.0
    %1617 = vmatprep.subr.mxu0 0.0
    %1618 = vmatpush1.msra.mxu0 0.0
    %1619 = vmatprep.subr.mxu0 0.0
    %1620 = vmatpush1.msra.mxu0 0.0
    %1621 = vmatprep.subr.mxu0 0.0
    %1622 = vmatpush1.msra.mxu0 0.0
    %1623 = vmatprep.subr.mxu0 0.0
    %1624 = vmatpush1.msra.mxu0 0.0
    %1625 = vmatprep.subr.mxu0 0.0
    %1626 = vmatpush1.msra.mxu0 0.0
    %1627 = vmatprep.subr.mxu0 0.0
    %1628 = vmatpush1.msra.mxu0 0.0
    %1629 = vmatprep.subr.mxu0 0.0
    %1630 = vmatpush1.msra.mxu0 0.0
    %1631 = vmatprep.subr.mxu0 0.0
    %1632 = vmatpush1.msra.mxu0 0.0
    %1633 = vmatprep.subr.mxu0 0.0
    %1634 = vmatpush1.msra.mxu0 0.0
    %1635 = vmatprep.subr.mxu0 0.0
    %1636 = vmatpush1.msra.mxu0 0.0
    %1637 = vmatprep.subr.mxu0 0.0
    %1638 = vmatpush1.msra.mxu0 0.0
    %1639 = vmatprep.subr.mxu0 0.0
    %1640 = vmatpush1.msra.mxu0 0.0
    %1641 = vmatprep.mubr.f32.mxu0 0.0
    %1642 = vmatmul.mubr.f32.gmra.mrb[0].mxu0 %v1483
    %v1643 = vpop.f32.mrb[0].mxu0
    %v1644 = vadd.f32 %v1572, %v1643
    %v1645 = vpop.f32.mrb[0].mxu0
    %1646 = vdwg.mxu0
    %v1647 = vmul.f32 %v1555, %v1644
    %v1648 = vld [vmem:[%s13] sm:$0xff]
    %v1649 = vld [vmem:[%s13 + $0x8] sm:$0xff]
    %v1650 = vld [vmem:[%s13 + $0x10] sm:$0xff]
    %v1651 = vld [vmem:[%s13 + $0x18] sm:$0xff]
    %v1652 = vld [vmem:[%s13 + $0x20] sm:$0xff]
    %v1653 = vld [vmem:[%s13 + $0x28] sm:$0xff]
    %v1654 = vld [vmem:[%s13 + $0x30] sm:$0xff]
    %v1655 = vld [vmem:[%s13 + $0x38] sm:$0xff]
    %v1656 = vld [vmem:[%s13 + $0x40] sm:$0xff]
    %v1657 = vld [vmem:[%s13 + $0x48] sm:$0xff]
    %v1658 = vld [vmem:[%s13 + $0x50] sm:$0xff]
    %v1659 = vld [vmem:[%s13 + $0x58] sm:$0xff]
    %v1660 = vld [vmem:[%s13 + $0x60] sm:$0xff]
    %v1661 = vld [vmem:[%s13 + $0x68] sm:$0xff]
    %v1662 = vld [vmem:[%s13 + $0x70] sm:$0xff]
    %v1663 = vld [vmem:[%s13 + $0x78] sm:$0xff]
    %v1664 = vld [vmem:[%s14] sm:$0x1]
    %v1666 = vlaneseq
    %v1667 = vshrl.u32 %v1666, 7
    %v1668 = vsub.s32 0, %v1667
    %v1669 = vrot.slane %v1664, %v1668
    %1671 = vmatprep.subr.mxu0 0.0
    %1672 = vmatpush1.msra.mxu0 %v1648
    %1673 = vmatprep.subr.mxu0 0.0
    %1674 = vmatpush1.msra.mxu0 %v1649
    %1675 = vmatprep.subr.mxu0 0.0
    %1676 = vmatpush1.msra.mxu0 %v1650
    %1677 = vmatprep.subr.mxu0 0.0
    %1678 = vmatpush1.msra.mxu0 %v1651
    %1679 = vmatprep.subr.mxu0 0.0
    %1680 = vmatpush1.msra.mxu0 %v1652
    %1681 = vmatprep.subr.mxu0 0.0
    %1682 = vmatpush1.msra.mxu0 %v1653
    %1683 = vmatprep.subr.mxu0 0.0
    %1684 = vmatpush1.msra.mxu0 %v1654
    %1685 = vmatprep.subr.mxu0 0.0
    %1686 = vmatpush1.msra.mxu0 %v1655
    %1687 = vmatprep.subr.mxu0 0.0
    %1688 = vmatpush1.msra.mxu0 %v1656
    %1689 = vmatprep.subr.mxu0 0.0
    %1690 = vmatpush1.msra.mxu0 %v1657
    %1691 = vmatprep.subr.mxu0 0.0
    %1692 = vmatpush1.msra.mxu0 %v1658
    %1693 = vmatprep.subr.mxu0 0.0
    %1694 = vmatpush1.msra.mxu0 %v1659
    %1695 = vmatprep.subr.mxu0 0.0
    %1696 = vmatpush1.msra.mxu0 %v1660
    %1697 = vmatprep.subr.mxu0 0.0
    %1698 = vmatpush1.msra.mxu0 %v1661
    %1699 = vmatprep.subr.mxu0 0.0
    %1700 = vmatpush1.msra.mxu0 %v1662
    %1701 = vmatprep.subr.mxu0 0.0
    %1702 = vmatpush1.msra.mxu0 %v1663
    %1703 = vmatprep.subr.mxu0 0.0
    %1704 = vmatpush1.msra.mxu0 0.0
    %1705 = vmatprep.subr.mxu0 0.0
    %1706 = vmatpush1.msra.mxu0 0.0
    %1707 = vmatprep.subr.mxu0 0.0
    %1708 = vmatpush1.msra.mxu0 0.0
    %1709 = vmatprep.subr.mxu0 0.0
    %1710 = vmatpush1.msra.mxu0 0.0
    %1711 = vmatprep.subr.mxu0 0.0
    %1712 = vmatpush1.msra.mxu0 0.0
    %1713 = vmatprep.subr.mxu0 0.0
    %1714 = vmatpush1.msra.mxu0 0.0
    %1715 = vmatprep.subr.mxu0 0.0
    %1716 = vmatpush1.msra.mxu0 0.0
    %1717 = vmatprep.subr.mxu0 0.0
    %1718 = vmatpush1.msra.mxu0 0.0
    %1719 = vmatprep.subr.mxu0 0.0
    %1720 = vmatpush1.msra.mxu0 0.0
    %1721 = vmatprep.subr.mxu0 0.0
    %1722 = vmatpush1.msra.mxu0 0.0
    %1723 = vmatprep.subr.mxu0 0.0
    %1724 = vmatpush1.msra.mxu0 0.0
    %1725 = vmatprep.subr.mxu0 0.0
    %1726 = vmatpush1.msra.mxu0 0.0
    %1727 = vmatprep.subr.mxu0 0.0
    %1728 = vmatpush1.msra.mxu0 0.0
    %1729 = vmatprep.subr.mxu0 0.0
    %1730 = vmatpush1.msra.mxu0 0.0
    %1731 = vmatprep.subr.mxu0 0.0
    %1732 = vmatpush1.msra.mxu0 0.0
    %1733 = vmatprep.subr.mxu0 0.0
    %1734 = vmatpush1.msra.mxu0 0.0
    %1735 = vmatprep.mubr.f32.mxu0 0.0
    %1736 = vmatmul.mubr.f32.gmra.mrb[0].mxu0 %v1647
    %v1737 = vpop.f32.mrb[0].mxu0
    %v1738 = vadd.f32 %v1669, %v1737
    %v1739 = vpop.f32.mrb[0].mxu0
    %1740 = vdwg.mxu0
    %1741 = vst [vmem:[#allocation11] sm:$0x3] %v1555
    %1742 = vst [vmem:[#allocation12] sm:$0x3] %v1644
    %vm1743 = vcmask 74752
    %1744 = vst.msk [vmem:[#allocation14] sm:$0x3] %vm1743, %v1738
    // Predicated region
    $region82: #{_lambda_.1} parent=1 // pred_check
      _
    $region83: #{_lambda_.1} parent=1 // pred_check_branch
      %1746 = sbr.rel (0) target = $region85
    $region84: #{_lambda_.1} parent=1 // pred_region
      %s1748 = ssub.s32 32, 32
      %1749 = vsyncadd [#allocation4], %s1748
      %s1751 = sshll.u32 [#allocation11], 4
      %s1752 = int_to_ptr.vmem [resolvable:$true] %s1751
      %1754 = dma.vmem_to_hbm [thread:$0]  %s1752, 32, %s15, [#allocation4]
    $region85: #{_lambda_.1} parent=1 // pred_fallthru
      _
    // Predicated region
    $region86: #{_lambda_.1} parent=1 // pred_check
      _
    $region87: #{_lambda_.1} parent=1 // pred_check_branch
      %1756 = sbr.rel (0) target = $region89
    $region88: #{_lambda_.1} parent=1 // pred_region
      %s1758 = ssub.s32 32, 32
      %1759 = vsyncadd [#allocation13], %s1758
      %s1761 = sshll.u32 [#allocation12], 4
      %s1762 = int_to_ptr.vmem [resolvable:$true] %s1761
      %1764 = dma.vmem_to_hbm [thread:$0]  %s1762, 32, %s16, [#allocation13]
    $region89: #{_lambda_.1} parent=1 // pred_fallthru
      _
    // Predicated region
    $region90: #{_lambda_.1} parent=1 // pred_check
      _
    $region91: #{_lambda_.1} parent=1 // pred_check_branch
      %1766 = sbr.rel (0) target = $region93
    $region92: #{_lambda_.1} parent=1 // pred_region
      %s1768 = ssub.s32 32, 32
      %1769 = vsyncadd [#allocation13], %s1768
      %s1771 = sshll.u32 [#allocation14], 4
      %s1772 = int_to_ptr.vmem [resolvable:$true] %s1771
      %1774 = dma.vmem_to_hbm [thread:$0]  %s1772, 32, %s17, [#allocation13]
    $region93: #{_lambda_.1} parent=1 // pred_fallthru
      _
    // Predicated region
    $region94: #{_lambda_.1} parent=1 // pred_check
      _
    $region95: #{_lambda_.1} parent=1 // pred_check_branch
      %1776 = sbr.rel (0) target = $region97
    $region96: #{_lambda_.1} parent=1 // pred_region
      %1777 = dma.done [#allocation4], 32
    $region97: #{_lambda_.1} parent=1 // pred_fallthru
      _
    // Predicated region
    $region98: #{_lambda_.1} parent=1 // pred_check
      _
    $region99: #{_lambda_.1} parent=1 // pred_check_branch
      %1779 = sbr.rel (0) target = $region101
    $region100: #{_lambda_.1} parent=1 // pred_region
      %1780 = dma.done [#allocation13], 32
    $region101: #{_lambda_.1} parent=1 // pred_fallthru
      _
    // Predicated region
    $region102: #{_lambda_.1} parent=1 // pred_check
      _
    $region103: #{_lambda_.1} parent=1 // pred_check_branch
      %1782 = sbr.rel (0) target = $region105
    $region104: #{_lambda_.1} parent=1 // pred_region
      %1783 = dma.done [#allocation13], 32
    $region105: #{_lambda_.1} parent=1 // pred_fallthru
      _
    %1784 = vsyncpa [#allocation3], 1
    %1785 = vsyncpa [#allocation6], 1
    %1786 = vsyncpa [#allocation9], 1
    %1787 = vsyncpa [#allocation4], 1
    %1788 = vsyncpa [#allocation13], 1

</llo_original>
